<compile_context>
chip_gen: v5e
topology: v5e:2x2
jax: 0.10.0
libtpu: 0.0.40
codegen_flags: <defaults>
</compile_context>

<pallas_src>
import functools

import jax
import jax.numpy as jnp
from jax.experimental import pallas as pl
from jax.experimental.pallas import tpu as pltpu

EPS = 1e-5
LANE = 128
PIXEL_TILE_TARGET = 1024  # rows per 1x1 / elementwise grid step


def _round_up(x, m):
    return ((x + m - 1) // m) * m


@functools.lru_cache(maxsize=1)
def _vmem_limit_bytes():
    """96 MiB on 128-MiB-VMEM parts (v5e/v6e), ~48 MiB on v7x, safe fallback."""
    try:
        cap = int(pltpu.get_tpu_info().vmem_capacity_bytes)
    except Exception:  # pragma: no cover - conservative fallback
        return 32 * 1024 * 1024
    return int(min(96 * 1024 * 1024, max(32 * 1024 * 1024, (cap * 3) // 4)))


def _pixel_tile(p, target=PIXEL_TILE_TARGET):
    """Fixed pixel tile (multiple of 8); ragged last block handled in-kernel."""
    return max(8, min(target, _round_up(p, 8)))


def _centered_stats_2d(y, mask=None, count=None):
    """Per-tile BN partials: (sum, sum of squared deviations from tile mean).

    y: (rows, C) f32.  mask: optional (rows, 1) bool marking valid rows.
    Returns a (2, C) f32 array.
    """
    if mask is not None:
        y0 = jnp.where(mask, y, 0.0)
        cnt = jnp.sum(mask.astype(jnp.float32))
        s = jnp.sum(y0, axis=0, keepdims=True)
        mu = s / cnt
        d = jnp.where(mask, y - mu, 0.0)
    else:
        s = jnp.sum(y, axis=0, keepdims=True)
        mu = s / count
        d = y - mu
    ss = jnp.sum(d * d, axis=0, keepdims=True)
    return jnp.concatenate([s, ss], axis=0)


# ---------------------------------------------------------------------------
# 1x1x1 conv (channel matmul) + per-tile BN partials.  Optionally fuses the
# previous stage's BN+ReLU as a prologue FMA.
# ---------------------------------------------------------------------------
def _conv1x1_kernel(*refs, fused, ragged, total_rows, matmul_dtype):
    if fused:
        x_ref, sc_ref, sh_ref, w_ref, y_ref, stats_ref = refs
    else:
        x_ref, w_ref, y_ref, stats_ref = refs
    a = x_ref[...].astype(jnp.float32)
    if fused:
        a = jnp.maximum(a * sc_ref[...] + sh_ref[...], 0.0)
    y = jnp.dot(a.astype(matmul_dtype), w_ref[...],
                preferred_element_type=jnp.float32)            # (TILE, Cout_p)
    y_ref[...] = y.astype(y_ref.dtype)

    rows = y.shape[0]
    if ragged:
        base = pl.program_id(0) * rows
        valid = (base + jax.lax.broadcasted_iota(jnp.int32, (rows, 1), 0)
                 ) < total_rows
        stats = _centered_stats_2d(y, mask=valid)
    else:
        stats = _centered_stats_2d(y, count=float(rows))
    stats_ref[...] = stats[None]                               # (1, 2, Cout_p)


def _conv1x1_call(x, w, scale=None, shift=None, *, out_dtype, matmul_dtype):
    p, cin = x.shape
    cout = w.shape[1]
    tile = _pixel_tile(p)
    nt = -(-p // tile)
    fused = scale is not None
    kern = functools.partial(_conv1x1_kernel, fused=fused,
                             ragged=(p % tile != 0), total_rows=p,
                             matmul_dtype=matmul_dtype)
    in_specs = [pl.BlockSpec((tile, cin), lambda i: (i, 0))]
    args = [x]
    if fused:
        in_specs += [pl.BlockSpec((1, cin), lambda i: (0, 0)),
                     pl.BlockSpec((1, cin), lambda i: (0, 0))]
        args += [scale, shift]
    in_specs.append(pl.BlockSpec((cin, cout), lambda i: (0, 0)))
    args.append(w)
    y, stats = pl.pallas_call(
        kern,
        grid=(nt,),
        in_specs=in_specs,
        out_specs=[pl.BlockSpec((tile, cout), lambda i: (i, 0)),
                   pl.BlockSpec((1, 2, cout), lambda i: (i, 0, 0))],
        out_shape=[jax.ShapeDtypeStruct((p, cout), out_dtype),
                   jax.ShapeDtypeStruct((nt, 2, cout), jnp.float32)],
        compiler_params=pltpu.CompilerParams(
            dimension_semantics=("parallel",),
            vmem_limit_bytes=_vmem_limit_bytes()),
    )(*args)
    counts = jnp.full((nt,), float(tile), jnp.float32)
    counts = counts.at[-1].set(float(p - (nt - 1) * tile))
    return y, stats, counts


# ---------------------------------------------------------------------------
# CausalConv3d k=(2,3,3) with fused BN1+ReLU prologue.
#   grid = (n parallel, t arbitrary); the previous activated frame lives in a
#   persistent VMEM ping-pong slab (each HBM frame is read exactly once).
#   Conv = 18 direct MXU matmuls over the zero-padded slab; spatial shifts are
#   sublane rolls of the flattened slab (XLU), so there is no im2col scratch
#   and no misaligned slice+reshape relayout.
# ---------------------------------------------------------------------------
def _causal_conv_kernel(x_ref, sc_ref, sh_ref, w_ref, y_ref, stats_ref, hbuf,
                        *, matmul_dtype):
    t_i = pl.program_id(1)
    _, _, h, w, cin = x_ref.shape
    _, hp, wp_al, _ = hbuf.shape
    cout = w_ref.shape[-1]
    m = hp * wp_al

    # New sequence (t == 0): wipe both slabs.  The zeroed "previous" slab IS
    # the causal front padding; the zeroed borders are the H/W halo.
    @pl.when(t_i == 0)
    def _():
        hbuf[...] = jnp.zeros_like(hbuf)

    cur = jax.lax.rem(t_i, 2)
    prev = 1 - cur

    # Fused BN1 + ReLU prologue on the current frame, written into the padded
    # slab interior (slab kept in f32 so the sublane rolls stay 32-bit).
    xt = x_ref[0, 0].astype(jnp.float32)                        # (H, W, Cin)
    act = jnp.maximum(xt * sc_ref[...].reshape(1, 1, cin)
                      + sh_ref[...].reshape(1, 1, cin), 0.0)

    @pl.when(cur == 0)
    def _():
        hbuf[0, 1:h + 1, 1:w + 1, :] = act

    @pl.when(cur == 1)
    def _():
        hbuf[1, 1:h + 1, 1:w + 1, :] = act

    # Direct tap accumulation: 18 matmuls (K = Cin_p) into an f32 accumulator.
    acc = jnp.zeros((m, cout), jnp.float32)
    for kt, slot in ((0, prev), (1, cur)):
        flat = hbuf[slot].reshape(m, cin)                       # (M, Cin) f32
        for kh in range(3):
            for kw in range(3):
                off = kh * wp_al + kw
                src = flat if off == 0 else pltpu.roll(flat, m - off, axis=0)
                acc = acc + jnp.dot(src.astype(matmul_dtype),
                                    w_ref[kt * 9 + kh * 3 + kw],
                                    preferred_element_type=jnp.float32)

    y = acc.reshape(hp, wp_al, cout)[:h, :w, :]                 # valid pixels
    y_ref[0, 0] = y.astype(y_ref.dtype)

    # Per-(n, t) BN2 partials (mean-centered).
    s = jnp.sum(jnp.sum(y, axis=0), axis=0, keepdims=True)      # (1, Cout)
    mu = s / float(h * w)
    d = y - mu.reshape(1, 1, cout)
    ss = jnp.sum(jnp.sum(d * d, axis=0), axis=0, keepdims=True)
    stats_ref[...] = jnp.concatenate([s, ss], axis=0)[None, None]


def _causal_conv_call(y1_5d, scale, shift, w_taps, *, out_dtype, matmul_dtype):
    n, t, h, w, cin = y1_5d.shape
    cout = w_taps.shape[-1]
    hp = h + 2
    wp_al = _round_up(w + 2, 8)                                  # sublane pitch
    kern = functools.partial(_causal_conv_kernel, matmul_dtype=matmul_dtype)
    y2, stats = pl.pallas_call(
        kern,
        grid=(n, t),
        in_specs=[
            pl.BlockSpec((1, 1, h, w, cin), lambda i, j: (i, j, 0, 0, 0)),
            pl.BlockSpec((1, cin), lambda i, j: (0, 0)),
            pl.BlockSpec((1, cin), lambda i, j: (0, 0)),
            pl.BlockSpec((18, cin, cout), lambda i, j: (0, 0, 0)),
        ],
        out_specs=[
            pl.BlockSpec((1, 1, h, w, cout), lambda i, j: (i, j, 0, 0, 0)),
            pl.BlockSpec((1, 1, 2, cout), lambda i, j: (i, j, 0, 0)),
        ],
        out_shape=[
            jax.ShapeDtypeStruct((n, t, h, w, cout), out_dtype),
            jax.ShapeDtypeStruct((n, t, 2, cout), jnp.float32),
        ],
        scratch_shapes=[pltpu.VMEM((2, hp, wp_al, cin), jnp.float32)],
        compiler_params=pltpu.CompilerParams(
            dimension_semantics=("parallel", "arbitrary"),
            vmem_limit_bytes=_vmem_limit_bytes()),
    )(y1_5d, scale, shift, w_taps)
    counts = jnp.full((n * t,), float(h * w), jnp.float32)
    return y2, stats, counts


# ---------------------------------------------------------------------------
# Final BN3 + ReLU + identity residual (tiled elementwise).
# ---------------------------------------------------------------------------
def _bn_relu_res_kernel(y_ref, sc_ref, sh_ref, r_ref, o_ref):
    o = jnp.maximum(y_ref[...].astype(jnp.float32) * sc_ref[...] + sh_ref[...],
                    0.0)
    o_ref[...] = o + r_ref[...]


def _bn_relu_res_call(y, scale, shift, residual):
    p, c = y.shape
    tile = _pixel_tile(p)
    nt = -(-p // tile)
    return pl.pallas_call(
        _bn_relu_res_kernel,
        grid=(nt,),
        in_specs=[pl.BlockSpec((tile, c), lambda i: (i, 0)),
                  pl.BlockSpec((1, c), lambda i: (0, 0)),
                  pl.BlockSpec((1, c), lambda i: (0, 0)),
                  pl.BlockSpec((tile, c), lambda i: (i, 0))],
        out_specs=pl.BlockSpec((tile, c), lambda i: (i, 0)),
        out_shape=jax.ShapeDtypeStruct((p, c), jnp.float32),
        compiler_params=pltpu.CompilerParams(
            dimension_semantics=("parallel",),
            vmem_limit_bytes=_vmem_limit_bytes()),
    )(y, scale, shift, residual)


def _bn_scale_shift(stats, counts, gamma, beta, eps=EPS):
    """Chan-merge per-tile (sum, centered M2) partials into y*scale+shift."""
    c = stats.shape[-1]
    stats = stats.reshape(-1, 2, c)
    sums = stats[:, 0, :]                                        # (K, C)
    m2s = stats[:, 1, :]                                         # (K, C)
    counts = counts.reshape(-1, 1).astype(jnp.float32)
    total = jnp.sum(counts)
    mean = jnp.sum(sums, axis=0) / total
    tile_mean = sums / counts
    m2 = jnp.sum(m2s, axis=0) + jnp.sum(
        counts * jnp.square(tile_mean - mean[None, :]), axis=0)
    var = jnp.maximum(m2 / total, 0.0)                           # biased var
    scale = gamma.reshape(-1) * jax.lax.rsqrt(var + eps)
    shift = beta.reshape(-1) - mean * scale
    return scale.reshape(1, -1), shift.reshape(1, -1)


# ---------------------------------------------------------------------------
# Full Bottleneck3D forward.
# ---------------------------------------------------------------------------
def bottleneck3d_forward(x, w_down, w_conv, w_up, gammas, betas,
                         *, matmul_dtype=jnp.bfloat16):
    """Bottleneck3D forward (identity-residual configuration).

    x:       (N, Cin, T, H, W) float32
    w_down:  (Cb,  Cin, 1, 1, 1) with Cb = Cin // 2
    w_conv:  (Cb,  Cb,  2, 3, 3)
    w_up:    (Cout, Cb, 1, 1, 1) with Cout == Cin
    gammas, betas: 3-tuples of per-stage BatchNorm3d affine vectors
    matmul_dtype: jnp.bfloat16 (default; MXU-native, bf16 intermediates) or
                  jnp.float32 (exact PyTorch numerics, f32 intermediates).
    """
    n, cin, t, h, w = x.shape
    cb = w_down.shape[0]
    cout = w_up.shape[0]
    assert cout == cin, "projection branch not implemented"
    # TODO(synk): projection branch (Conv3d 1x1x1 + BN, no ReLU) for
    # out_channels != in_channels is not implemented; the default Bottleneck3D
    # (out_channels=None) uses the identity residual handled here.
    # TODO(synk): BatchNorm running_mean/running_var buffers are not updated.

    act_dtype = jnp.bfloat16 if matmul_dtype == jnp.bfloat16 else jnp.float32
    cin_p = _round_up(cin, LANE)
    cb_p = _round_up(cb, LANE)
    cout_p = _round_up(cout, LANE)
    p = n * t * h * w

    # --- layout glue: NCTHW -> (pixels, channels), channels padded to 128 ---
    # TODO(synk): accepting/emitting channels-last at the module boundary would
    # drop these two XLA transpose passes.
    x_flat = jnp.transpose(x, (0, 2, 3, 4, 1)).reshape(p, cin)
    x_flat = jnp.pad(x_flat, ((0, 0), (0, cin_p - cin)))

    # --- weights: PyTorch (out, in, k...) -> matmul layout, channel-padded ---
    w1 = jnp.pad(w_down.reshape(cb, cin).T,
                 ((0, cin_p - cin), (0, cb_p - cb))).astype(matmul_dtype)
    w2 = jnp.transpose(w_conv, (2, 3, 4, 1, 0))                  # (2,3,3,Cb,Cb)
    w2 = jnp.pad(w2, ((0, 0), (0, 0), (0, 0),
                      (0, cb_p - cb), (0, cb_p - cb)))
    w2 = w2.reshape(18, cb_p, cb_p).astype(matmul_dtype)         # tap-major
    w3 = jnp.pad(w_up.reshape(cout, cb).T,
                 ((0, cb_p - cb), (0, cout_p - cout))).astype(matmul_dtype)

    def pad_gb(g, b, cp):
        return (jnp.pad(g, (0, cp - g.shape[0]), constant_values=1.0),
                jnp.pad(b, (0, cp - b.shape[0])))

    g1, b1 = pad_gb(gammas[0], betas[0], cb_p)
    g2, b2 = pad_gb(gammas[1], betas[1], cb_p)
    g3, b3 = pad_gb(gammas[2], betas[2], cout_p)

    # --- stage 1: 1x1x1 down-projection (+ BN1 partials) ---
    y1, st1, cnt1 = _conv1x1_call(x_flat, w1, out_dtype=act_dtype,
                                  matmul_dtype=matmul_dtype)
    sc1, sh1 = _bn_scale_shift(st1, cnt1, g1, b1)

    # --- stage 2: fused BN1+ReLU prologue + CausalConv3d (2,3,3), carried
    #     previous frame in VMEM (+ BN2 partials) ---
    y2, st2, cnt2 = _causal_conv_call(y1.reshape(n, t, h, w, cb_p), sc1, sh1,
                                      w2, out_dtype=act_dtype,
                                      matmul_dtype=matmul_dtype)
    sc2, sh2 = _bn_scale_shift(st2, cnt2, g2, b2)

    # --- stage 3: fused BN2+ReLU prologue + 1x1x1 up-projection ---
    y3, st3, cnt3 = _conv1x1_call(y2.reshape(p, cb_p), w3, sc2, sh2,
                                  out_dtype=act_dtype,
                                  matmul_dtype=matmul_dtype)
    sc3, sh3 = _bn_scale_shift(st3, cnt3, g3, b3)

    # --- BN3 + ReLU + identity residual ---
    out_flat = _bn_relu_res_call(y3, sc3, sh3, x_flat)           # (P, cout_p)

    out = out_flat[:, :cout].reshape(n, t, h, w, cout)
    return jnp.transpose(out, (0, 4, 1, 2, 3))                   # NCTHW


# ---------------------------------------------------------------------------
# Pure-XLA reference (training-mode BN, gamma=1, beta=0) for a self-check.
# ---------------------------------------------------------------------------
def _reference_forward(x, w_down, w_conv, w_up, eps=EPS):
    hi = jax.lax.Precision.HIGHEST

    def bn_relu(y):
        mean = jnp.mean(y, axis=(0, 2, 3, 4), keepdims=True)
        var = jnp.mean((y - mean) ** 2, axis=(0, 2, 3, 4), keepdims=True)
        return jnp.maximum((y - mean) * jax.lax.rsqrt(var + eps), 0.0)

    def conv1(y, wgt):
        return jnp.einsum("ncthw,oc->nothw", y,
                          wgt.reshape(wgt.shape[0], wgt.shape[1]), precision=hi)

    hid = bn_relu(conv1(x, w_down))
    hp = jnp.pad(hid, ((0, 0), (0, 0), (1, 0), (1, 1), (1, 1)))
    _, _, t, h, w = hid.shape
    y2 = 0.0
    for kt in range(2):
        for kh in range(3):
            for kw in range(3):
                y2 = y2 + jnp.einsum(
                    "ncthw,oc->nothw",
                    hp[:, :, kt:kt + t, kh:kh + h, kw:kw + w],
                    w_conv[:, :, kt, kh, kw], precision=hi)
    return bn_relu(conv1(bn_relu(y2), w_up)) + x


if __name__ == "__main__":
    key = jax.random.PRNGKey(0)
    kx, k1, k2, k3 = jax.random.split(key, 4)

    N, CIN, T, H, W = 2, 4, 8, 16, 16
    CB = CIN // 2

    x = jax.random.normal(kx, (N, CIN, T, H, W), dtype=jnp.float32)

    def kaiming_uniform(k, shape, fan_in):
        bound = 1.0 / (fan_in ** 0.5)
        return jax.random.uniform(k, shape, jnp.float32, -bound, bound)

    w_down = kaiming_uniform(k1, (CB, CIN, 1, 1, 1), CIN)
    w_conv = kaiming_uniform(k2, (CB, CB, 2, 3, 3), CB * 2 * 3 * 3)
    w_up = kaiming_uniform(k3, (CIN, CB, 1, 1, 1), CB)
    gammas = (jnp.ones((CB,), jnp.float32), jnp.ones((CB,), jnp.float32),
              jnp.ones((CIN,), jnp.float32))
    betas = (jnp.zeros((CB,), jnp.float32), jnp.zeros((CB,), jnp.float32),
             jnp.zeros((CIN,), jnp.float32))

    ref = _reference_forward(x, w_down, w_conv, w_up)

    # Default fast path: bf16 MXU operands + bf16 intermediates (loose check).
    out_bf16 = jax.block_until_ready(
        bottleneck3d_forward(x, w_down, w_conv, w_up, gammas, betas))
    assert out_bf16.shape == (N, CIN, T, H, W)
    err_bf16 = float(jnp.max(jnp.abs(out_bf16 - ref)))
    assert err_bf16 < 3e-1, f"bf16 path mismatch vs XLA reference: {err_bf16}"

    # f32 path: exact PyTorch semantics (tight check).
    out_f32 = jax.block_until_ready(
        bottleneck3d_forward(x, w_down, w_conv, w_up, gammas, betas,
                             matmul_dtype=jnp.float32))
    err_f32 = float(jnp.max(jnp.abs(out_f32 - ref)))
    assert err_f32 < 2e-3, f"f32 path mismatch vs XLA reference: {err_f32}"

    print("KERNEL_OK")
</pallas_src>

<mosaic_0001>
module attributes {stable_mosaic.version = 11 : i64} {
  func.func @_conv1x1_kernel(%arg0: i32, %arg1: memref<1024x128xf32, #tpu.memory_space<vmem>>, %arg2: memref<128x128xbf16, #tpu.memory_space<vmem>>, %arg3: memref<1024x128xbf16, #tpu.memory_space<vmem>>, %arg4: memref<1x2x128xf32, #tpu.memory_space<vmem>>) attributes {dimension_semantics = [#tpu.dimension_semantics<parallel>], iteration_bounds = array<i64: 4>, scalar_prefetch = 0 : i64, scratch_operands = 0 : i64, tpu.core_type = #tpu.core_type<tc>, window_params = [{transform_indices = @transform_0, window_bounds = array<i64: 1024, 128>}, {pipeline_mode = #tpu.pipeline_mode<synchronous>, transform_indices = @transform_1, window_bounds = array<i64: 128, 128>}, {transform_indices = @transform_2, window_bounds = array<i64: 1024, 128>}, {transform_indices = @transform_3, window_bounds = array<i64: 1, 2, 128>}]} {
    %c0 = arith.constant 0 : index
    %c0_0 = arith.constant 0 : index
    %0 = vector.load %arg1[%c0, %c0_0] : memref<1024x128xf32, #tpu.memory_space<vmem>>, vector<1024x128xf32>
    %1 = arith.truncf %0 : vector<1024x128xf32> to vector<1024x128xbf16>
    %c0_1 = arith.constant 0 : index
    %c0_2 = arith.constant 0 : index
    %2 = vector.load %arg2[%c0_1, %c0_2] : memref<128x128xbf16, #tpu.memory_space<vmem>>, vector<128x128xbf16>
    %cst = arith.constant dense<0.000000e+00> : vector<1024x128xf32>
    %3 = tpu.matmul %1, %2, %cst {dimension_numbers = #tpu.dot_dimension_numbers<[1], [0], [0], [1], [0, 0, 1, 1], [], []>} : vector<1024x128xbf16>, vector<128x128xbf16>, vector<1024x128xf32> -> vector<1024x128xf32>
    %4 = arith.truncf %3 : vector<1024x128xf32> to vector<1024x128xbf16>
    %c0_3 = arith.constant 0 : index
    %c0_4 = arith.constant 0 : index
    %5 = vector.load %arg3[%c0_3, %c0_4] : memref<1024x128xbf16, #tpu.memory_space<vmem>>, vector<1024x128xbf16>
    tpu.vector_store %arg3[%c0_3, %c0_4], %4 {strides = array<i32>} : memref<1024x128xbf16, #tpu.memory_space<vmem>>, vector<1024x128xbf16>,
    %cst_5 = arith.constant dense<0.000000e+00> : vector<128xf32>
    %6 = vector.multi_reduction <add>, %3, %cst_5 [0] : vector<1024x128xf32> to vector<128xf32>
    %7 = vector.shape_cast %6 : vector<128xf32> to vector<1x128xf32>
    %cst_6 = arith.constant 1.024000e+03 : f32
    %8 = vector.broadcast %cst_6 : f32 to vector<1x128xf32>
    %9 = arith.divf %7, %8 : vector<1x128xf32>
    %10 = vector.broadcast %9 : vector<1x128xf32> to vector<1024x128xf32>
    %11 = arith.subf %3, %10 : vector<1024x128xf32>
    %12 = arith.mulf %11, %11 : vector<1024x128xf32>
    %cst_7 = arith.constant dense<0.000000e+00> : vector<128xf32>
    %13 = vector.multi_reduction <add>, %12, %cst_7 [0] : vector<1024x128xf32> to vector<128xf32>
    %14 = vector.shape_cast %13 : vector<128xf32> to vector<1x128xf32>
    %15 = tpu.concatenate %7, %14 in 0 : vector<1x128xf32>, vector<1x128xf32> -> vector<2x128xf32>
    %16 = vector.shape_cast %15 : vector<2x128xf32> to vector<1x2x128xf32>
    %c0_8 = arith.constant 0 : index
    %c0_9 = arith.constant 0 : index
    %c0_10 = arith.constant 0 : index
    %17 = vector.load %arg4[%c0_8, %c0_9, %c0_10] : memref<1x2x128xf32, #tpu.memory_space<vmem>>, vector<1x2x128xf32>
    tpu.vector_store %arg4[%c0_8, %c0_9, %c0_10], %16 {strides = array<i32>} : memref<1x2x128xf32, #tpu.memory_space<vmem>>, vector<1x2x128xf32>,
    return
  }
  func.func @transform_0(%arg0: i32) -> (i32, i32) {
    %c0_i32 = arith.constant 0 : i32
    %c0_i32_0 = arith.constant 0 : i32
    return %arg0, %c0_i32 : i32, i32
  }
  func.func @transform_1(%arg0: i32) -> (i32, i32) {
    %c0_i32 = arith.constant 0 : i32
    %c0_i32_0 = arith.constant 0 : i32
    %c0_i32_1 = arith.constant 0 : i32
    return %c0_i32, %c0_i32_0 : i32, i32
  }
  func.func @transform_2(%arg0: i32) -> (i32, i32) {
    %c0_i32 = arith.constant 0 : i32
    %c0_i32_0 = arith.constant 0 : i32
    return %arg0, %c0_i32 : i32, i32
  }
  func.func @transform_3(%arg0: i32) -> (i32, i32, i32) {
    %c0_i32 = arith.constant 0 : i32
    %c0_i32_0 = arith.constant 0 : i32
    %c0_i32_1 = arith.constant 0 : i32
    return %arg0, %c0_i32, %c0_i32_0 : i32, i32, i32
  }
}

</mosaic_0001>

<llo_original>
// kernel: tpu_custom_call.1
$region0: #{tpu_custom_call.1}
  #allocation0 [shape = 'u32[]', space=smem, size = 0x4, offset = 0x4, fixed_abs, tag = 'smem constant byte address 0x4 - core index']
  #allocation1 [shape = 'u32[72,128]{1,0:T(1,128)}', space=vmem, size = 0x9000, scoped, tag = 'internal scratch']
  %s0 = inlined_call_operand.hbm [shape: f32[4096,128], index: 0, kind: input, shape index: {}]
  %s1 = inlined_call_operand.hbm [shape: bf16[128,128], index: 1, kind: input, shape index: {}]
  %s2 = inlined_call_operand.hbm [shape: bf16[4096,128], index: 2, kind: output, shape index: {0}]
  %s3 = inlined_call_operand.hbm [shape: f32[4,2,128], index: 3, kind: output, shape index: {1}]
  %4 = xla_tuple %s2, %s3
  %s5 = sld [smem:[#allocation0]]
  $region57: #{tpu_custom_call.1} parent=0
    _
  %s7 = ssub.s32 1, %s5
  %s8 = scalar_select 0, %s7, %s5
  $region1: #{tpu_custom_call.1} parent=0
    #allocation2 [shape = 'u8[1048576]{0}', space=vmem, size = 0x100000, scoped, tag = 'input window, operand 0']
    #allocation3 [shape = 's32[2]{0}', space=sflag, size = 0x8, scoped, tag = 'scoped memory for tpu_custom_call.1']
    #allocation4 [shape = 's32[2]{0}', space=sflag, size = 0x8, scoped, tag = 'scoped memory for tpu_custom_call.1']
    #allocation5 [shape = 'u8[32768]{0}', space=vmem, size = 0x8000, scoped, tag = 'input window, operand 1, single buffered']
    #allocation6 [shape = 's32[1]{0}', space=sflag, size = 0x4, scoped, tag = 'scoped memory for tpu_custom_call.1']
    #allocation7 [shape = 'u8[524288]{0}', space=vmem, size = 0x80000, scoped, tag = 'output window, operand 0']
    #allocation8 [shape = 'u8[2048]{0}', space=vmem, size = 0x800, scoped, tag = 'output window, operand 1']
    #allocation9 [shape = 's32[2]{0}', space=sflag, size = 0x8, scoped, tag = 'scoped memory for tpu_custom_call.1']
    %9 = vsyncpa [#allocation3], 0
    %s10 = scalar_lea.sflag [#allocation3], 1
    %11 = vsyncpa %s10, 0
    %12 = vsyncpa [#allocation6], 0
    %13 = vsyncpa [#allocation4], 0
    %s14 = scalar_lea.sflag [#allocation4], 1
    %15 = vsyncpa %s14, 0
    %16 = vsyncpa [#allocation9], 0
    %s17 = scalar_lea.sflag [#allocation9], 1
    %18 = vsyncpa %s17, 0
    loop: start=0, step=1, limit=6
    $region2: #{tpu_custom_call.1} parent=1 // loop_pre_header
      _
    $region3: #{tpu_custom_call.1} parent=1 // loop_header
      %s20 = sphi 0, %s24
      %p21 = scmp.ge.s32.totalorder %s20, 6
      %s30 = sphi 0, %s32
      %s33 = sphi 0, %s30
      %s34 = sphi 0, %s33
      %s50 = sphi 0, %s34
      %s54 = sphi 0, %s54
      %s56 = sphi 0, %s54
      %s57 = sphi 0, %s56
      %s71 = sphi 0, %s57
      %s77 = sphi 0, %s79
      %s80 = sphi 0, %s77
      %s81 = sphi 0, %s80
      %s97 = sphi 0, %s81
      %s103 = sphi 0, %s105
      %s106 = sphi 0, %s103
      %s107 = sphi 0, %s106
      %s123 = sphi 0, %s107
    $region4: #{tpu_custom_call.1} parent=1 // loop_header_branch
      %23 = sbr.rel (%p21) target = $region8
    $region5: #{tpu_custom_call.1} parent=1 // loop_body
      %s25 = ssub.s32 %s20, 1
      %s26 = ssub.s32 %s20, 2
      %s27 = sadd.s32 %s20, 1
      %s28 = ssub.s32 %s20, %s27
      %p29 = scmp.eq.s32.totalorder %s28, 0
      %s31 = sadd.s32 %s30, 1
      %s32 = scalar_select %p29, %s30, %s31
      %p35 = pneg %p29
      %p36 = scmp.eq.s32.totalorder %s20, 3
      %p37 = por %p35, %p36
      %p38 = scmp.ne.s32.totalorder %s30, %s33
      %p39 = scmp.eq.s32.totalorder %s20, 0
      %p40 = por %p38, %p39
      %p41 = scmp.ne.s32.totalorder %s30, %s33
      %p42 = scmp.eq.s32.totalorder %s25, 3
      %p43 = por %p41, %p42
      %p44 = scmp.ne.s32.totalorder %s33, %s34
      %p45 = scmp.eq.s32.totalorder %s25, 0
      %p46 = por %p44, %p45
      %p47 = scmp.ne.s32.totalorder %s33, %s34
      %p48 = scmp.eq.s32.totalorder %s26, 3
      %p49 = por %p47, %p48
      %p51 = scmp.ne.s32.totalorder %s34, %s50
      %p52 = scmp.eq.s32.totalorder %s26, 0
      %p53 = por %p51, %p52
      %s55 = sadd.s32 %s54, 1
      %p58 = scmp.eq.s32.totalorder %s20, 3
      %p59 = scmp.ne.s32.totalorder %s54, %s56
      %p60 = scmp.eq.s32.totalorder %s20, 0
      %p61 = por %p59, %p60
      %p62 = scmp.ne.s32.totalorder %s54, %s56
      %p63 = scmp.eq.s32.totalorder %s25, 3
      %p64 = por %p62, %p63
      %p65 = scmp.ne.s32.totalorder %s56, %s57
      %p66 = scmp.eq.s32.totalorder %s25, 0
      %p67 = por %p65, %p66
      %p68 = scmp.ne.s32.totalorder %s56, %s57
      %p69 = scmp.eq.s32.totalorder %s26, 3
      %p70 = por %p68, %p69
      %p72 = scmp.ne.s32.totalorder %s57, %s71
      %p73 = scmp.eq.s32.totalorder %s26, 0
      %p74 = por %p72, %p73
      %s75 = ssub.s32 %s20, %s27
      %p76 = scmp.eq.s32.totalorder %s75, 0
      %s78 = sadd.s32 %s77, 1
      %s79 = scalar_select %p76, %s77, %s78
      %p82 = pneg %p76
      %p83 = scmp.eq.s32.totalorder %s20, 3
      %p84 = por %p82, %p83
      %p85 = scmp.ne.s32.totalorder %s77, %s80
      %p86 = scmp.eq.s32.totalorder %s20, 0
      %p87 = por %p85, %p86
      %p88 = scmp.ne.s32.totalorder %s77, %s80
      %p89 = scmp.eq.s32.totalorder %s25, 3
      %p90 = por %p88, %p89
      %p91 = scmp.ne.s32.totalorder %s80, %s81
      %p92 = scmp.eq.s32.totalorder %s25, 0
      %p93 = por %p91, %p92
      %p94 = scmp.ne.s32.totalorder %s80, %s81
      %p95 = scmp.eq.s32.totalorder %s26, 3
      %p96 = por %p94, %p95
      %p98 = scmp.ne.s32.totalorder %s81, %s97
      %p99 = scmp.eq.s32.totalorder %s26, 0
      %p100 = por %p98, %p99
      %s101 = ssub.s32 %s20, %s27
      %p102 = scmp.eq.s32.totalorder %s101, 0
      %s104 = sadd.s32 %s103, 1
      %s105 = scalar_select %p102, %s103, %s104
      %p108 = pneg %p102
      %p109 = scmp.eq.s32.totalorder %s20, 3
      %p110 = por %p108, %p109
      %p111 = scmp.ne.s32.totalorder %s103, %s106
      %p112 = scmp.eq.s32.totalorder %s20, 0
      %p113 = por %p111, %p112
      %p114 = scmp.ne.s32.totalorder %s103, %s106
      %p115 = scmp.eq.s32.totalorder %s25, 3
      %p116 = por %p114, %p115
      %p117 = scmp.ne.s32.totalorder %s106, %s107
      %p118 = scmp.eq.s32.totalorder %s25, 0
      %p119 = por %p117, %p118
      %p120 = scmp.ne.s32.totalorder %s106, %s107
      %p121 = scmp.eq.s32.totalorder %s26, 3
      %p122 = por %p120, %p121
      %p124 = scmp.ne.s32.totalorder %s107, %s123
      %p125 = scmp.eq.s32.totalorder %s26, 0
      %p126 = por %p124, %p125
      %p127 = scmp.le.s32.totalorder 1, %s20
      %p128 = scmp.lt.s32.totalorder %s20, 5
      %p129 = pnand %p127, %p128
      %p130 = pneg %p129
      // Predicated region
      $region9: #{tpu_custom_call.1} parent=5 // pred_check
        _
      $region10: #{tpu_custom_call.1} parent=5 // pred_check_branch
        %132 = sbr.rel (%p129) target = $region12
      $region11: #{tpu_custom_call.1} parent=5 // pred_region
        %s133 = ssub.s32 %s20, 1
        // Predicated region
        $region13: #{tpu_custom_call.1} parent=11 // pred_check
          %p134 = pneg %p67
        $region14: #{tpu_custom_call.1} parent=11 // pred_check_branch
          %136 = sbr.rel (%p134) target = $region16
        $region15: #{tpu_custom_call.1} parent=11 // pred_region
          %138 = vsyncadd [#allocation6], 0
          %s139 = sshll.u32 %s1, 4
          %s140 = int_to_ptr.hbm [resolvable:$true] %s139
          %s141 = sshll.u32 [#allocation5], 4
          %s142 = int_to_ptr.vmem [resolvable:$true] %s141
          %147 = dma.hbm_to_vmem [thread:$0]  %s140, 1024, %s142, [#allocation6], 64, 64, 4
        $region16: #{tpu_custom_call.1} parent=11 // pred_fallthru
          _
      $region12: #{tpu_custom_call.1} parent=5 // pred_fallthru
        _
      %p148 = scmp.lt.s32.totalorder %s20, 4
      // Predicated region
      $region17: #{tpu_custom_call.1} parent=5 // pred_check
        %p149 = pneg %p148
      $region18: #{tpu_custom_call.1} parent=5 // pred_check_branch
        %151 = sbr.rel (%p149) target = $region20
      $region19: #{tpu_custom_call.1} parent=5 // pred_region
        // Predicated region
        $region21: #{tpu_custom_call.1} parent=19 // pred_check
          %p152 = pneg %p40
        $region22: #{tpu_custom_call.1} parent=19 // pred_check_branch
          %154 = sbr.rel (%p152) target = $region24
        $region23: #{tpu_custom_call.1} parent=19 // pred_region
          %s155 = sand.u32 %s30, 1
          %s156 = scalar_lea.sflag [#allocation3], %s155
          %s157 = sand.u32 %s30, 1
          %s158 = smul.addr %s157, 1024
          %s159 = scalar_lea.vmem [#allocation2], %s158
          %s160 = smul.u32 128, %s20
          %162 = vsyncadd %s156, 0
          %s163 = smul.addr %s160, 8
          %s164 = scalar_lea.hbm %s0, %s163
          %s165 = sshll.u32 %s164, 4
          %s166 = int_to_ptr.hbm [resolvable:$true] %s165
          %s167 = sshll.u32 %s159, 4
          %s168 = int_to_ptr.vmem [resolvable:$true] %s167
          %173 = dma.hbm_to_vmem [thread:$0]  %s166, 16384, %s168, %s156, 128, 128, 8
        $region24: #{tpu_custom_call.1} parent=19 // pred_fallthru
          _
      $region20: #{tpu_custom_call.1} parent=5 // pred_fallthru
        _
      %p174 = scmp.le.s32.totalorder 1, %s20
      %p175 = scmp.lt.s32.totalorder %s20, 5
      %p176 = pnand %p174, %p175
      %p177 = pneg %p176
      // Predicated region
      $region25: #{tpu_custom_call.1} parent=5 // pred_check
        _
      $region26: #{tpu_custom_call.1} parent=5 // pred_check_branch
        %179 = sbr.rel (%p176) target = $region28
      $region27: #{tpu_custom_call.1} parent=5 // pred_region
        %s180 = ssub.s32 %s20, 1
        %s181 = sand.u32 %s33, 1
        %s182 = scalar_lea.sflag [#allocation3], %s181
        %s183 = sand.u32 %s33, 1
        %s184 = smul.addr %s183, 1024
        %s185 = scalar_lea.vmem [#allocation2], %s184
        // Predicated region
        $region29: #{tpu_custom_call.1} parent=27 // pred_check
          %p186 = pneg %p46
        $region30: #{tpu_custom_call.1} parent=27 // pred_check_branch
          %188 = sbr.rel (%p186) target = $region32
        $region31: #{tpu_custom_call.1} parent=27 // pred_region
          %190 = dma.done %s182, 16384
        $region32: #{tpu_custom_call.1} parent=27 // pred_fallthru
          _
        // Predicated region
        $region33: #{tpu_custom_call.1} parent=27 // pred_check
          %p191 = pneg %p67
        $region34: #{tpu_custom_call.1} parent=27 // pred_check_branch
          %193 = sbr.rel (%p191) target = $region36
        $region35: #{tpu_custom_call.1} parent=27 // pred_region
          %195 = dma.done [#allocation6], 1024
        $region36: #{tpu_custom_call.1} parent=27 // pred_fallthru
          _
        %s196 = sand.u32 %s33, 1
        %s197 = scalar_lea.sflag [#allocation3], %s196
        %s198 = sand.u32 %s33, 1
        %s199 = smul.addr %s198, 1024
        %s200 = scalar_lea.vmem [#allocation2], %s199
        %p201 = pneg %p46
        %p202 = pneg %p43
        %p203 = pneg %p67
        %p204 = pneg %p64
        %p205 = pneg %p93
        %p206 = pneg %p90
        %s207 = sand.u32 %s80, 1
        %s208 = scalar_lea.sflag [#allocation4], %s207
        %s209 = sand.u32 %s80, 1
        %s210 = smul.addr %s209, 512
        %s211 = scalar_lea.vmem [#allocation7], %s210
        %p212 = pneg %p119
        %p213 = pneg %p116
        %s214 = sand.u32 %s106, 1
        %s215 = scalar_lea.sflag [#allocation9], %s214
        %s216 = sand.u32 %s106, 1
        %s217 = smul.addr %s216, 2
        %s218 = scalar_lea.vmem [#allocation8], %s217
        %s219 = smul.u32 128, %s25
        %s220 = smul.u32 128, %s25
        %v221 = vld [vmem:[%s185] sm:$0xff]
        %v222 = vld [vmem:[%s185 + $0x8] sm:$0xff]
        %v223 = vld [vmem:[%s185 + $0x10] sm:$0xff]
        %v224 = vld [vmem:[%s185 + $0x18] sm:$0xff]
        %v225 = vld [vmem:[%s185 + $0x20] sm:$0xff]
        %v226 = vld [vmem:[%s185 + $0x28] sm:$0xff]
        %v227 = vld [vmem:[%s185 + $0x30] sm:$0xff]
        %v228 = vld [vmem:[%s185 + $0x38] sm:$0xff]
        %v229 = vld [vmem:[%s185 + $0x40] sm:$0xff]
        %v230 = vld [vmem:[%s185 + $0x48] sm:$0xff]
        %v231 = vld [vmem:[%s185 + $0x50] sm:$0xff]
        %v232 = vld [vmem:[%s185 + $0x58] sm:$0xff]
        %v233 = vld [vmem:[%s185 + $0x60] sm:$0xff]
        %v234 = vld [vmem:[%s185 + $0x68] sm:$0xff]
        %v235 = vld [vmem:[%s185 + $0x70] sm:$0xff]
        %v236 = vld [vmem:[%s185 + $0x78] sm:$0xff]
        %v237 = vld [vmem:[%s185 + $0x80] sm:$0xff]
        %v238 = vld [vmem:[%s185 + $0x88] sm:$0xff]
        %v239 = vld [vmem:[%s185 + $0x90] sm:$0xff]
        %v240 = vld [vmem:[%s185 + $0x98] sm:$0xff]
        %v241 = vld [vmem:[%s185 + $0xa0] sm:$0xff]
        %v242 = vld [vmem:[%s185 + $0xa8] sm:$0xff]
        %v243 = vld [vmem:[%s185 + $0xb0] sm:$0xff]
        %v244 = vld [vmem:[%s185 + $0xb8] sm:$0xff]
        %v245 = vld [vmem:[%s185 + $0xc0] sm:$0xff]
        %v246 = vld [vmem:[%s185 + $0xc8] sm:$0xff]
        %v247 = vld [vmem:[%s185 + $0xd0] sm:$0xff]
        %v248 = vld [vmem:[%s185 + $0xd8] sm:$0xff]
        %v249 = vld [vmem:[%s185 + $0xe0] sm:$0xff]
        %v250 = vld [vmem:[%s185 + $0xe8] sm:$0xff]
        %v251 = vld [vmem:[%s185 + $0xf0] sm:$0xff]
        %v252 = vld [vmem:[%s185 + $0xf8] sm:$0xff]
        %v253 = vld [vmem:[%s185 + $0x100] sm:$0xff]
        %v254 = vld [vmem:[%s185 + $0x108] sm:$0xff]
        %v255 = vld [vmem:[%s185 + $0x110] sm:$0xff]
        %v256 = vld [vmem:[%s185 + $0x118] sm:$0xff]
        %v257 = vld [vmem:[%s185 + $0x120] sm:$0xff]
        %v258 = vld [vmem:[%s185 + $0x128] sm:$0xff]
        %v259 = vld [vmem:[%s185 + $0x130] sm:$0xff]
        %v260 = vld [vmem:[%s185 + $0x138] sm:$0xff]
        %v261 = vld [vmem:[%s185 + $0x140] sm:$0xff]
        %v262 = vld [vmem:[%s185 + $0x148] sm:$0xff]
        %v263 = vld [vmem:[%s185 + $0x150] sm:$0xff]
        %v264 = vld [vmem:[%s185 + $0x158] sm:$0xff]
        %v265 = vld [vmem:[%s185 + $0x160] sm:$0xff]
        %v266 = vld [vmem:[%s185 + $0x168] sm:$0xff]
        %v267 = vld [vmem:[%s185 + $0x170] sm:$0xff]
        %v268 = vld [vmem:[%s185 + $0x178] sm:$0xff]
        %v269 = vld [vmem:[%s185 + $0x180] sm:$0xff]
        %v270 = vld [vmem:[%s185 + $0x188] sm:$0xff]
        %v271 = vld [vmem:[%s185 + $0x190] sm:$0xff]
        %v272 = vld [vmem:[%s185 + $0x198] sm:$0xff]
        %v273 = vld [vmem:[%s185 + $0x1a0] sm:$0xff]
        %v274 = vld [vmem:[%s185 + $0x1a8] sm:$0xff]
        %v275 = vld [vmem:[%s185 + $0x1b0] sm:$0xff]
        %v276 = vld [vmem:[%s185 + $0x1b8] sm:$0xff]
        %v277 = vld [vmem:[%s185 + $0x1c0] sm:$0xff]
        %v278 = vld [vmem:[%s185 + $0x1c8] sm:$0xff]
        %v279 = vld [vmem:[%s185 + $0x1d0] sm:$0xff]
        %v280 = vld [vmem:[%s185 + $0x1d8] sm:$0xff]
        %v281 = vld [vmem:[%s185 + $0x1e0] sm:$0xff]
        %v282 = vld [vmem:[%s185 + $0x1e8] sm:$0xff]
        %v283 = vld [vmem:[%s185 + $0x1f0] sm:$0xff]
        %v284 = vld [vmem:[%s185 + $0x1f8] sm:$0xff]
        %v285 = vld [vmem:[%s185 + $0x200] sm:$0xff]
        %v286 = vld [vmem:[%s185 + $0x208] sm:$0xff]
        %v287 = vld [vmem:[%s185 + $0x210] sm:$0xff]
        %v288 = vld [vmem:[%s185 + $0x218] sm:$0xff]
        %v289 = vld [vmem:[%s185 + $0x220] sm:$0xff]
        %v290 = vld [vmem:[%s185 + $0x228] sm:$0xff]
        %v291 = vld [vmem:[%s185 + $0x230] sm:$0xff]
        %v292 = vld [vmem:[%s185 + $0x238] sm:$0xff]
        %v293 = vld [vmem:[%s185 + $0x240] sm:$0xff]
        %v294 = vld [vmem:[%s185 + $0x248] sm:$0xff]
        %v295 = vld [vmem:[%s185 + $0x250] sm:$0xff]
        %v296 = vld [vmem:[%s185 + $0x258] sm:$0xff]
        %v297 = vld [vmem:[%s185 + $0x260] sm:$0xff]
        %v298 = vld [vmem:[%s185 + $0x268] sm:$0xff]
        %v299 = vld [vmem:[%s185 + $0x270] sm:$0xff]
        %v300 = vld [vmem:[%s185 + $0x278] sm:$0xff]
        %v301 = vld [vmem:[%s185 + $0x280] sm:$0xff]
        %v302 = vld [vmem:[%s185 + $0x288] sm:$0xff]
        %v303 = vld [vmem:[%s185 + $0x290] sm:$0xff]
        %v304 = vld [vmem:[%s185 + $0x298] sm:$0xff]
        %v305 = vld [vmem:[%s185 + $0x2a0] sm:$0xff]
        %v306 = vld [vmem:[%s185 + $0x2a8] sm:$0xff]
        %v307 = vld [vmem:[%s185 + $0x2b0] sm:$0xff]
        %v308 = vld [vmem:[%s185 + $0x2b8] sm:$0xff]
        %v309 = vld [vmem:[%s185 + $0x2c0] sm:$0xff]
        %v310 = vld [vmem:[%s185 + $0x2c8] sm:$0xff]
        %v311 = vld [vmem:[%s185 + $0x2d0] sm:$0xff]
        %v312 = vld [vmem:[%s185 + $0x2d8] sm:$0xff]
        %v313 = vld [vmem:[%s185 + $0x2e0] sm:$0xff]
        %v314 = vld [vmem:[%s185 + $0x2e8] sm:$0xff]
        %v315 = vld [vmem:[%s185 + $0x2f0] sm:$0xff]
        %v316 = vld [vmem:[%s185 + $0x2f8] sm:$0xff]
        %v317 = vld [vmem:[%s185 + $0x300] sm:$0xff]
        %v318 = vld [vmem:[%s185 + $0x308] sm:$0xff]
        %v319 = vld [vmem:[%s185 + $0x310] sm:$0xff]
        %v320 = vld [vmem:[%s185 + $0x318] sm:$0xff]
        %v321 = vld [vmem:[%s185 + $0x320] sm:$0xff]
        %v322 = vld [vmem:[%s185 + $0x328] sm:$0xff]
        %v323 = vld [vmem:[%s185 + $0x330] sm:$0xff]
        %v324 = vld [vmem:[%s185 + $0x338] sm:$0xff]
        %v325 = vld [vmem:[%s185 + $0x340] sm:$0xff]
        %v326 = vld [vmem:[%s185 + $0x348] sm:$0xff]
        %v327 = vld [vmem:[%s185 + $0x350] sm:$0xff]
        %v328 = vld [vmem:[%s185 + $0x358] sm:$0xff]
        %v329 = vld [vmem:[%s185 + $0x360] sm:$0xff]
        %v330 = vld [vmem:[%s185 + $0x368] sm:$0xff]
        %v331 = vld [vmem:[%s185 + $0x370] sm:$0xff]
        %v332 = vld [vmem:[%s185 + $0x378] sm:$0xff]
        %v333 = vld [vmem:[%s185 + $0x380] sm:$0xff]
        %v334 = vld [vmem:[%s185 + $0x388] sm:$0xff]
        %v335 = vld [vmem:[%s185 + $0x390] sm:$0xff]
        %v336 = vld [vmem:[%s185 + $0x398] sm:$0xff]
        %v337 = vld [vmem:[%s185 + $0x3a0] sm:$0xff]
        %v338 = vld [vmem:[%s185 + $0x3a8] sm:$0xff]
        %v339 = vld [vmem:[%s185 + $0x3b0] sm:$0xff]
        %v340 = vld [vmem:[%s185 + $0x3b8] sm:$0xff]
        %v341 = vld [vmem:[%s185 + $0x3c0] sm:$0xff]
        %v342 = vld [vmem:[%s185 + $0x3c8] sm:$0xff]
        %v343 = vld [vmem:[%s185 + $0x3d0] sm:$0xff]
        %v344 = vld [vmem:[%s185 + $0x3d8] sm:$0xff]
        %v345 = vld [vmem:[%s185 + $0x3e0] sm:$0xff]
        %v346 = vld [vmem:[%s185 + $0x3e8] sm:$0xff]
        %v347 = vld [vmem:[%s185 + $0x3f0] sm:$0xff]
        %v348 = vld [vmem:[%s185 + $0x3f8] sm:$0xff]
        %v349 = vpack.c.bf16 %v222, %v221
        %v350 = vpack.c.bf16 %v224, %v223
        %v351 = vpack.c.bf16 %v226, %v225
        %v352 = vpack.c.bf16 %v228, %v227
        %v353 = vpack.c.bf16 %v230, %v229
        %v354 = vpack.c.bf16 %v232, %v231
        %v355 = vpack.c.bf16 %v234, %v233
        %v356 = vpack.c.bf16 %v236, %v235
        %v357 = vpack.c.bf16 %v238, %v237
        %v358 = vpack.c.bf16 %v240, %v239
        %v359 = vpack.c.bf16 %v242, %v241
        %v360 = vpack.c.bf16 %v244, %v243
        %v361 = vpack.c.bf16 %v246, %v245
        %v362 = vpack.c.bf16 %v248, %v247
        %v363 = vpack.c.bf16 %v250, %v249
        %v364 = vpack.c.bf16 %v252, %v251
        %v365 = vpack.c.bf16 %v254, %v253
        %v366 = vpack.c.bf16 %v256, %v255
        %v367 = vpack.c.bf16 %v258, %v257
        %v368 = vpack.c.bf16 %v260, %v259
        %v369 = vpack.c.bf16 %v262, %v261
        %v370 = vpack.c.bf16 %v264, %v263
        %v371 = vpack.c.bf16 %v266, %v265
        %v372 = vpack.c.bf16 %v268, %v267
        %v373 = vpack.c.bf16 %v270, %v269
        %v374 = vpack.c.bf16 %v272, %v271
        %v375 = vpack.c.bf16 %v274, %v273
        %v376 = vpack.c.bf16 %v276, %v275
        %v377 = vpack.c.bf16 %v278, %v277
        %v378 = vpack.c.bf16 %v280, %v279
        %v379 = vpack.c.bf16 %v282, %v281
        %v380 = vpack.c.bf16 %v284, %v283
        %v381 = vpack.c.bf16 %v286, %v285
        %v382 = vpack.c.bf16 %v288, %v287
        %v383 = vpack.c.bf16 %v290, %v289
        %v384 = vpack.c.bf16 %v292, %v291
        %v385 = vpack.c.bf16 %v294, %v293
        %v386 = vpack.c.bf16 %v296, %v295
        %v387 = vpack.c.bf16 %v298, %v297
        %v388 = vpack.c.bf16 %v300, %v299
        %v389 = vpack.c.bf16 %v302, %v301
        %v390 = vpack.c.bf16 %v304, %v303
        %v391 = vpack.c.bf16 %v306, %v305
        %v392 = vpack.c.bf16 %v308, %v307
        %v393 = vpack.c.bf16 %v310, %v309
        %v394 = vpack.c.bf16 %v312, %v311
        %v395 = vpack.c.bf16 %v314, %v313
        %v396 = vpack.c.bf16 %v316, %v315
        %v397 = vpack.c.bf16 %v318, %v317
        %v398 = vpack.c.bf16 %v320, %v319
        %v399 = vpack.c.bf16 %v322, %v321
        %v400 = vpack.c.bf16 %v324, %v323
        %v401 = vpack.c.bf16 %v326, %v325
        %v402 = vpack.c.bf16 %v328, %v327
        %v403 = vpack.c.bf16 %v330, %v329
        %v404 = vpack.c.bf16 %v332, %v331
        %v405 = vpack.c.bf16 %v334, %v333
        %v406 = vpack.c.bf16 %v336, %v335
        %v407 = vpack.c.bf16 %v338, %v337
        %v408 = vpack.c.bf16 %v340, %v339
        %v409 = vpack.c.bf16 %v342, %v341
        %v410 = vpack.c.bf16 %v344, %v343
        %v411 = vpack.c.bf16 %v346, %v345
        %v412 = vpack.c.bf16 %v348, %v347
        %v413 = vld [vmem:[#allocation5] sm:$0xf]
        %v414 = vld [vmem:[#allocation5 + $0x4] sm:$0xf]
        %v415 = vld [vmem:[#allocation5 + $0x8] sm:$0xf]
        %v416 = vld [vmem:[#allocation5 + $0xc] sm:$0xf]
        %v417 = vld [vmem:[#allocation5 + $0x10] sm:$0xf]
        %v418 = vld [vmem:[#allocation5 + $0x14] sm:$0xf]
        %v419 = vld [vmem:[#allocation5 + $0x18] sm:$0xf]
        %v420 = vld [vmem:[#allocation5 + $0x1c] sm:$0xf]
        %v421 = vld [vmem:[#allocation5 + $0x20] sm:$0xf]
        %v422 = vld [vmem:[#allocation5 + $0x24] sm:$0xf]
        %v423 = vld [vmem:[#allocation5 + $0x28] sm:$0xf]
        %v424 = vld [vmem:[#allocation5 + $0x2c] sm:$0xf]
        %v425 = vld [vmem:[#allocation5 + $0x30] sm:$0xf]
        %v426 = vld [vmem:[#allocation5 + $0x34] sm:$0xf]
        %v427 = vld [vmem:[#allocation5 + $0x38] sm:$0xf]
        %v428 = vld [vmem:[#allocation5 + $0x3c] sm:$0xf]
        %v445 = vunpack.c.l.b16 %v413
        %v446 = vunpack.c.l.b16 %v414
        %v447 = vunpack.c.l.b16 %v415
        %v448 = vunpack.c.l.b16 %v416
        %v449 = vunpack.c.l.b16 %v417
        %v450 = vunpack.c.l.b16 %v418
        %v451 = vunpack.c.l.b16 %v419
        %v452 = vunpack.c.l.b16 %v420
        %v453 = vunpack.c.l.b16 %v421
        %v454 = vunpack.c.l.b16 %v422
        %v455 = vunpack.c.l.b16 %v423
        %v456 = vunpack.c.l.b16 %v424
        %v457 = vunpack.c.l.b16 %v425
        %v458 = vunpack.c.l.b16 %v426
        %v459 = vunpack.c.l.b16 %v427
        %v460 = vunpack.c.l.b16 %v428
        %v461 = vpack.c.b16 %v446, %v445
        %v462 = vpack.c.b16 %v448, %v447
        %v463 = vpack.c.b16 %v450, %v449
        %v464 = vpack.c.b16 %v452, %v451
        %v465 = vpack.c.b16 %v454, %v453
        %v466 = vpack.c.b16 %v456, %v455
        %v467 = vpack.c.b16 %v458, %v457
        %v468 = vpack.c.b16 %v460, %v459
        %477 = vmatpush.bf16.msra.mxu0 %v468
        %478 = vmatpush.bf16.msra.mxu0 %v467
        %479 = vmatpush.bf16.msra.mxu0 %v466
        %480 = vmatpush.bf16.msra.mxu0 %v465
        %481 = vmatpush.bf16.msra.mxu0 %v464
        %482 = vmatpush.bf16.msra.mxu0 %v463
        %483 = vmatpush.bf16.msra.mxu0 %v462
        %484 = vmatpush.bf16.msra.mxu0 %v461
        %485 = vmatmul.bf16.gmra.mxu0 %v349
        %v486 = vpop.f32.mrf.mxu0
        %v487 = vadd.f32 0.0, %v486
        %v488 = vpop.f32.mrf.mxu0
        %v489 = vadd.f32 0.0, %v488
        %490 = vmatmul.bf16.gmra.mxu0 %v350
        %v491 = vpop.f32.mrf.mxu0
        %v492 = vadd.f32 0.0, %v491
        %v493 = vpop.f32.mrf.mxu0
        %v494 = vadd.f32 0.0, %v493
        %495 = vmatmul.bf16.gmra.mxu0 %v351
        %v496 = vpop.f32.mrf.mxu0
        %v497 = vadd.f32 0.0, %v496
        %v498 = vpop.f32.mrf.mxu0
        %v499 = vadd.f32 0.0, %v498
        %500 = vmatmul.bf16.gmra.mxu0 %v352
        %v501 = vpop.f32.mrf.mxu0
        %v502 = vadd.f32 0.0, %v501
        %v503 = vpop.f32.mrf.mxu0
        %v504 = vadd.f32 0.0, %v503
        %505 = vmatmul.bf16.gmra.mxu0 %v353
        %v506 = vpop.f32.mrf.mxu0
        %v507 = vadd.f32 0.0, %v506
        %v508 = vpop.f32.mrf.mxu0
        %v509 = vadd.f32 0.0, %v508
        %510 = vmatmul.bf16.gmra.mxu0 %v354
        %v511 = vpop.f32.mrf.mxu0
        %v512 = vadd.f32 0.0, %v511
        %v513 = vpop.f32.mrf.mxu0
        %v514 = vadd.f32 0.0, %v513
        %515 = vmatmul.bf16.gmra.mxu0 %v355
        %v516 = vpop.f32.mrf.mxu0
        %v517 = vadd.f32 0.0, %v516
        %v518 = vpop.f32.mrf.mxu0
        %v519 = vadd.f32 0.0, %v518
        %520 = vmatmul.bf16.gmra.mxu0 %v356
        %v521 = vpop.f32.mrf.mxu0
        %v522 = vadd.f32 0.0, %v521
        %v523 = vpop.f32.mrf.mxu0
        %v524 = vadd.f32 0.0, %v523
        %525 = vmatmul.bf16.gmra.mxu0 %v357
        %v526 = vpop.f32.mrf.mxu0
        %v527 = vadd.f32 0.0, %v526
        %v528 = vpop.f32.mrf.mxu0
        %v529 = vadd.f32 0.0, %v528
        %530 = vmatmul.bf16.gmra.mxu0 %v358
        %v531 = vpop.f32.mrf.mxu0
        %v532 = vadd.f32 0.0, %v531
        %v533 = vpop.f32.mrf.mxu0
        %v534 = vadd.f32 0.0, %v533
        %535 = vmatmul.bf16.gmra.mxu0 %v359
        %v536 = vpop.f32.mrf.mxu0
        %v537 = vadd.f32 0.0, %v536
        %v538 = vpop.f32.mrf.mxu0
        %v539 = vadd.f32 0.0, %v538
        %540 = vmatmul.bf16.gmra.mxu0 %v360
        %v541 = vpop.f32.mrf.mxu0
        %v542 = vadd.f32 0.0, %v541
        %v543 = vpop.f32.mrf.mxu0
        %v544 = vadd.f32 0.0, %v543
        %545 = vmatmul.bf16.gmra.mxu0 %v361
        %v546 = vpop.f32.mrf.mxu0
        %v547 = vadd.f32 0.0, %v546
        %v548 = vpop.f32.mrf.mxu0
        %v549 = vadd.f32 0.0, %v548
        %550 = vmatmul.bf16.gmra.mxu0 %v362
        %v551 = vpop.f32.mrf.mxu0
        %v552 = vadd.f32 0.0, %v551
        %v553 = vpop.f32.mrf.mxu0
        %v554 = vadd.f32 0.0, %v553
        %555 = vmatmul.bf16.gmra.mxu0 %v363
        %v556 = vpop.f32.mrf.mxu0
        %v557 = vadd.f32 0.0, %v556
        %v558 = vpop.f32.mrf.mxu0
        %v559 = vadd.f32 0.0, %v558
        %560 = vmatmul.bf16.gmra.mxu0 %v364
        %v561 = vpop.f32.mrf.mxu0
        %v562 = vadd.f32 0.0, %v561
        %v563 = vpop.f32.mrf.mxu0
        %v564 = vadd.f32 0.0, %v563
        %565 = vmatmul.bf16.gmra.mxu0 %v365
        %v566 = vpop.f32.mrf.mxu0
        %v567 = vadd.f32 0.0, %v566
        %v568 = vpop.f32.mrf.mxu0
        %v569 = vadd.f32 0.0, %v568
        %570 = vmatmul.bf16.gmra.mxu0 %v366
        %v571 = vpop.f32.mrf.mxu0
        %v572 = vadd.f32 0.0, %v571
        %v573 = vpop.f32.mrf.mxu0
        %v574 = vadd.f32 0.0, %v573
        %575 = vmatmul.bf16.gmra.mxu0 %v367
        %v576 = vpop.f32.mrf.mxu0
        %v577 = vadd.f32 0.0, %v576
        %v578 = vpop.f32.mrf.mxu0
        %v579 = vadd.f32 0.0, %v578
        %580 = vmatmul.bf16.gmra.mxu0 %v368
        %v581 = vpop.f32.mrf.mxu0
        %v582 = vadd.f32 0.0, %v581
        %v583 = vpop.f32.mrf.mxu0
        %v584 = vadd.f32 0.0, %v583
        %585 = vmatmul.bf16.gmra.mxu0 %v369
        %v586 = vpop.f32.mrf.mxu0
        %v587 = vadd.f32 0.0, %v586
        %v588 = vpop.f32.mrf.mxu0
        %v589 = vadd.f32 0.0, %v588
        %590 = vmatmul.bf16.gmra.mxu0 %v370
        %v591 = vpop.f32.mrf.mxu0
        %v592 = vadd.f32 0.0, %v591
        %v593 = vpop.f32.mrf.mxu0
        %v594 = vadd.f32 0.0, %v593
        %595 = vmatmul.bf16.gmra.mxu0 %v371
        %v596 = vpop.f32.mrf.mxu0
        %v597 = vadd.f32 0.0, %v596
        %v598 = vpop.f32.mrf.mxu0
        %v599 = vadd.f32 0.0, %v598
        %600 = vmatmul.bf16.gmra.mxu0 %v372
        %v601 = vpop.f32.mrf.mxu0
        %v602 = vadd.f32 0.0, %v601
        %v603 = vpop.f32.mrf.mxu0
        %v604 = vadd.f32 0.0, %v603
        %605 = vmatmul.bf16.gmra.mxu0 %v373
        %v606 = vpop.f32.mrf.mxu0
        %v607 = vadd.f32 0.0, %v606
        %v608 = vpop.f32.mrf.mxu0
        %v609 = vadd.f32 0.0, %v608
        %610 = vmatmul.bf16.gmra.mxu0 %v374
        %v611 = vpop.f32.mrf.mxu0
        %v612 = vadd.f32 0.0, %v611
        %v613 = vpop.f32.mrf.mxu0
        %v614 = vadd.f32 0.0, %v613
        %615 = vmatmul.bf16.gmra.mxu0 %v375
        %v616 = vpop.f32.mrf.mxu0
        %v617 = vadd.f32 0.0, %v616
        %v618 = vpop.f32.mrf.mxu0
        %v619 = vadd.f32 0.0, %v618
        %620 = vmatmul.bf16.gmra.mxu0 %v376
        %v621 = vpop.f32.mrf.mxu0
        %v622 = vadd.f32 0.0, %v621
        %v623 = vpop.f32.mrf.mxu0
        %v624 = vadd.f32 0.0, %v623
        %625 = vmatmul.bf16.gmra.mxu0 %v377
        %v626 = vpop.f32.mrf.mxu0
        %v627 = vadd.f32 0.0, %v626
        %v628 = vpop.f32.mrf.mxu0
        %v629 = vadd.f32 0.0, %v628
        %630 = vmatmul.bf16.gmra.mxu0 %v378
        %v631 = vpop.f32.mrf.mxu0
        %v632 = vadd.f32 0.0, %v631
        %v633 = vpop.f32.mrf.mxu0
        %v634 = vadd.f32 0.0, %v633
        %635 = vmatmul.bf16.gmra.mxu0 %v379
        %v636 = vpop.f32.mrf.mxu0
        %v637 = vadd.f32 0.0, %v636
        %v638 = vpop.f32.mrf.mxu0
        %v639 = vadd.f32 0.0, %v638
        %640 = vmatmul.bf16.gmra.mxu0 %v380
        %v641 = vpop.f32.mrf.mxu0
        %v642 = vadd.f32 0.0, %v641
        %v643 = vpop.f32.mrf.mxu0
        %v644 = vadd.f32 0.0, %v643
        %645 = vmatmul.bf16.gmra.mxu0 %v381
        %v646 = vpop.f32.mrf.mxu0
        %v647 = vadd.f32 0.0, %v646
        %v648 = vpop.f32.mrf.mxu0
        %v649 = vadd.f32 0.0, %v648
        %650 = vmatmul.bf16.gmra.mxu0 %v382
        %v651 = vpop.f32.mrf.mxu0
        %v652 = vadd.f32 0.0, %v651
        %v653 = vpop.f32.mrf.mxu0
        %v654 = vadd.f32 0.0, %v653
        %655 = vmatmul.bf16.gmra.mxu0 %v383
        %v656 = vpop.f32.mrf.mxu0
        %v657 = vadd.f32 0.0, %v656
        %v658 = vpop.f32.mrf.mxu0
        %v659 = vadd.f32 0.0, %v658
        %660 = vmatmul.bf16.gmra.mxu0 %v384
        %v661 = vpop.f32.mrf.mxu0
        %v662 = vadd.f32 0.0, %v661
        %v663 = vpop.f32.mrf.mxu0
        %v664 = vadd.f32 0.0, %v663
        %665 = vmatmul.bf16.gmra.mxu0 %v385
        %v666 = vpop.f32.mrf.mxu0
        %v667 = vadd.f32 0.0, %v666
        %v668 = vpop.f32.mrf.mxu0
        %v669 = vadd.f32 0.0, %v668
        %670 = vmatmul.bf16.gmra.mxu0 %v386
        %v671 = vpop.f32.mrf.mxu0
        %v672 = vadd.f32 0.0, %v671
        %v673 = vpop.f32.mrf.mxu0
        %v674 = vadd.f32 0.0, %v673
        %675 = vmatmul.bf16.gmra.mxu0 %v387
        %v676 = vpop.f32.mrf.mxu0
        %v677 = vadd.f32 0.0, %v676
        %v678 = vpop.f32.mrf.mxu0
        %v679 = vadd.f32 0.0, %v678
        %680 = vmatmul.bf16.gmra.mxu0 %v388
        %v681 = vpop.f32.mrf.mxu0
        %v682 = vadd.f32 0.0, %v681
        %v683 = vpop.f32.mrf.mxu0
        %v684 = vadd.f32 0.0, %v683
        %685 = vmatmul.bf16.gmra.mxu0 %v389
        %v686 = vpop.f32.mrf.mxu0
        %v687 = vadd.f32 0.0, %v686
        %v688 = vpop.f32.mrf.mxu0
        %v689 = vadd.f32 0.0, %v688
        %690 = vmatmul.bf16.gmra.mxu0 %v390
        %v691 = vpop.f32.mrf.mxu0
        %v692 = vadd.f32 0.0, %v691
        %v693 = vpop.f32.mrf.mxu0
        %v694 = vadd.f32 0.0, %v693
        %695 = vmatmul.bf16.gmra.mxu0 %v391
        %v696 = vpop.f32.mrf.mxu0
        %v697 = vadd.f32 0.0, %v696
        %v698 = vpop.f32.mrf.mxu0
        %v699 = vadd.f32 0.0, %v698
        %700 = vmatmul.bf16.gmra.mxu0 %v392
        %v701 = vpop.f32.mrf.mxu0
        %v702 = vadd.f32 0.0, %v701
        %v703 = vpop.f32.mrf.mxu0
        %v704 = vadd.f32 0.0, %v703
        %705 = vmatmul.bf16.gmra.mxu0 %v393
        %v706 = vpop.f32.mrf.mxu0
        %v707 = vadd.f32 0.0, %v706
        %v708 = vpop.f32.mrf.mxu0
        %v709 = vadd.f32 0.0, %v708
        %710 = vmatmul.bf16.gmra.mxu0 %v394
        %v711 = vpop.f32.mrf.mxu0
        %v712 = vadd.f32 0.0, %v711
        %v713 = vpop.f32.mrf.mxu0
        %v714 = vadd.f32 0.0, %v713
        %715 = vmatmul.bf16.gmra.mxu0 %v395
        %v716 = vpop.f32.mrf.mxu0
        %v717 = vadd.f32 0.0, %v716
        %v718 = vpop.f32.mrf.mxu0
        %v719 = vadd.f32 0.0, %v718
        %720 = vmatmul.bf16.gmra.mxu0 %v396
        %v721 = vpop.f32.mrf.mxu0
        %v722 = vadd.f32 0.0, %v721
        %v723 = vpop.f32.mrf.mxu0
        %v724 = vadd.f32 0.0, %v723
        %725 = vmatmul.bf16.gmra.mxu0 %v397
        %v726 = vpop.f32.mrf.mxu0
        %v727 = vadd.f32 0.0, %v726
        %v728 = vpop.f32.mrf.mxu0
        %v729 = vadd.f32 0.0, %v728
        %730 = vmatmul.bf16.gmra.mxu0 %v398
        %v731 = vpop.f32.mrf.mxu0
        %v732 = vadd.f32 0.0, %v731
        %v733 = vpop.f32.mrf.mxu0
        %v734 = vadd.f32 0.0, %v733
        %735 = vmatmul.bf16.gmra.mxu0 %v399
        %v736 = vpop.f32.mrf.mxu0
        %v737 = vadd.f32 0.0, %v736
        %v738 = vpop.f32.mrf.mxu0
        %v739 = vadd.f32 0.0, %v738
        %740 = vmatmul.bf16.gmra.mxu0 %v400
        %v741 = vpop.f32.mrf.mxu0
        %v742 = vadd.f32 0.0, %v741
        %v743 = vpop.f32.mrf.mxu0
        %v744 = vadd.f32 0.0, %v743
        %745 = vmatmul.bf16.gmra.mxu0 %v401
        %v746 = vpop.f32.mrf.mxu0
        %v747 = vadd.f32 0.0, %v746
        %v748 = vpop.f32.mrf.mxu0
        %v749 = vadd.f32 0.0, %v748
        %750 = vmatmul.bf16.gmra.mxu0 %v402
        %v751 = vpop.f32.mrf.mxu0
        %v752 = vadd.f32 0.0, %v751
        %v753 = vpop.f32.mrf.mxu0
        %v754 = vadd.f32 0.0, %v753
        %755 = vmatmul.bf16.gmra.mxu0 %v403
        %v756 = vpop.f32.mrf.mxu0
        %v757 = vadd.f32 0.0, %v756
        %v758 = vpop.f32.mrf.mxu0
        %v759 = vadd.f32 0.0, %v758
        %760 = vmatmul.bf16.gmra.mxu0 %v404
        %v761 = vpop.f32.mrf.mxu0
        %v762 = vadd.f32 0.0, %v761
        %v763 = vpop.f32.mrf.mxu0
        %v764 = vadd.f32 0.0, %v763
        %765 = vmatmul.bf16.gmra.mxu0 %v405
        %v766 = vpop.f32.mrf.mxu0
        %v767 = vadd.f32 0.0, %v766
        %v768 = vpop.f32.mrf.mxu0
        %v769 = vadd.f32 0.0, %v768
        %770 = vmatmul.bf16.gmra.mxu0 %v406
        %v771 = vpop.f32.mrf.mxu0
        %v772 = vadd.f32 0.0, %v771
        %v773 = vpop.f32.mrf.mxu0
        %v774 = vadd.f32 0.0, %v773
        %775 = vmatmul.bf16.gmra.mxu0 %v407
        %v776 = vpop.f32.mrf.mxu0
        %v777 = vadd.f32 0.0, %v776
        %v778 = vpop.f32.mrf.mxu0
        %v779 = vadd.f32 0.0, %v778
        %780 = vmatmul.bf16.gmra.mxu0 %v408
        %v781 = vpop.f32.mrf.mxu0
        %v782 = vadd.f32 0.0, %v781
        %v783 = vpop.f32.mrf.mxu0
        %v784 = vadd.f32 0.0, %v783
        %785 = vmatmul.bf16.gmra.mxu0 %v409
        %v786 = vpop.f32.mrf.mxu0
        %v787 = vadd.f32 0.0, %v786
        %v788 = vpop.f32.mrf.mxu0
        %v789 = vadd.f32 0.0, %v788
        %790 = vmatmul.bf16.gmra.mxu0 %v410
        %v791 = vpop.f32.mrf.mxu0
        %v792 = vadd.f32 0.0, %v791
        %v793 = vpop.f32.mrf.mxu0
        %v794 = vadd.f32 0.0, %v793
        %795 = vmatmul.bf16.gmra.mxu0 %v411
        %v796 = vpop.f32.mrf.mxu0
        %v797 = vadd.f32 0.0, %v796
        %v798 = vpop.f32.mrf.mxu0
        %v799 = vadd.f32 0.0, %v798
        %800 = vmatmul.bf16.gmra.mxu0 %v412
        %v801 = vpop.f32.mrf.mxu0
        %v802 = vadd.f32 0.0, %v801
        %v803 = vpop.f32.mrf.mxu0
        %v804 = vadd.f32 0.0, %v803
        %805 = vdwg.mxu0
        %v806 = vpack.c.bf16 %v487, %v487
        %v807 = vpack.c.bf16 %v489, %v489
        %v808 = vpack.c.bf16 %v492, %v492
        %v809 = vpack.c.bf16 %v494, %v494
        %v810 = vpack.c.bf16 %v497, %v497
        %v811 = vpack.c.bf16 %v499, %v499
        %v812 = vpack.c.bf16 %v502, %v502
        %v813 = vpack.c.bf16 %v504, %v504
        %v814 = vpack.c.bf16 %v507, %v507
        %v815 = vpack.c.bf16 %v509, %v509
        %v816 = vpack.c.bf16 %v512, %v512
        %v817 = vpack.c.bf16 %v514, %v514
        %v818 = vpack.c.bf16 %v517, %v517
        %v819 = vpack.c.bf16 %v519, %v519
        %v820 = vpack.c.bf16 %v522, %v522
        %v821 = vpack.c.bf16 %v524, %v524
        %v822 = vpack.c.bf16 %v527, %v527
        %v823 = vpack.c.bf16 %v529, %v529
        %v824 = vpack.c.bf16 %v532, %v532
        %v825 = vpack.c.bf16 %v534, %v534
        %v826 = vpack.c.bf16 %v537, %v537
        %v827 = vpack.c.bf16 %v539, %v539
        %v828 = vpack.c.bf16 %v542, %v542
        %v829 = vpack.c.bf16 %v544, %v544
        %v830 = vpack.c.bf16 %v547, %v547
        %v831 = vpack.c.bf16 %v549, %v549
        %v832 = vpack.c.bf16 %v552, %v552
        %v833 = vpack.c.bf16 %v554, %v554
        %v834 = vpack.c.bf16 %v557, %v557
        %v835 = vpack.c.bf16 %v559, %v559
        %v836 = vpack.c.bf16 %v562, %v562
        %v837 = vpack.c.bf16 %v564, %v564
        %v838 = vpack.c.bf16 %v567, %v567
        %v839 = vpack.c.bf16 %v569, %v569
        %v840 = vpack.c.bf16 %v572, %v572
        %v841 = vpack.c.bf16 %v574, %v574
        %v842 = vpack.c.bf16 %v577, %v577
        %v843 = vpack.c.bf16 %v579, %v579
        %v844 = vpack.c.bf16 %v582, %v582
        %v845 = vpack.c.bf16 %v584, %v584
        %v846 = vpack.c.bf16 %v587, %v587
        %v847 = vpack.c.bf16 %v589, %v589
        %v848 = vpack.c.bf16 %v592, %v592
        %v849 = vpack.c.bf16 %v594, %v594
        %v850 = vpack.c.bf16 %v597, %v597
        %v851 = vpack.c.bf16 %v599, %v599
        %v852 = vpack.c.bf16 %v602, %v602
        %v853 = vpack.c.bf16 %v604, %v604
        %v854 = vpack.c.bf16 %v607, %v607
        %v855 = vpack.c.bf16 %v609, %v609
        %v856 = vpack.c.bf16 %v612, %v612
        %v857 = vpack.c.bf16 %v614, %v614
        %v858 = vpack.c.bf16 %v617, %v617
        %v859 = vpack.c.bf16 %v619, %v619
        %v860 = vpack.c.bf16 %v622, %v622
        %v861 = vpack.c.bf16 %v624, %v624
        %v862 = vpack.c.bf16 %v627, %v627
        %v863 = vpack.c.bf16 %v629, %v629
        %v864 = vpack.c.bf16 %v632, %v632
        %v865 = vpack.c.bf16 %v634, %v634
        %v866 = vpack.c.bf16 %v637, %v637
        %v867 = vpack.c.bf16 %v639, %v639
        %v868 = vpack.c.bf16 %v642, %v642
        %v869 = vpack.c.bf16 %v644, %v644
        %v870 = vpack.c.bf16 %v647, %v647
        %v871 = vpack.c.bf16 %v649, %v649
        %v872 = vpack.c.bf16 %v652, %v652
        %v873 = vpack.c.bf16 %v654, %v654
        %v874 = vpack.c.bf16 %v657, %v657
        %v875 = vpack.c.bf16 %v659, %v659
        %v876 = vpack.c.bf16 %v662, %v662
        %v877 = vpack.c.bf16 %v664, %v664
        %v878 = vpack.c.bf16 %v667, %v667
        %v879 = vpack.c.bf16 %v669, %v669
        %v880 = vpack.c.bf16 %v672, %v672
        %v881 = vpack.c.bf16 %v674, %v674
        %v882 = vpack.c.bf16 %v677, %v677
        %v883 = vpack.c.bf16 %v679, %v679
        %v884 = vpack.c.bf16 %v682, %v682
        %v885 = vpack.c.bf16 %v684, %v684
        %v886 = vpack.c.bf16 %v687, %v687
        %v887 = vpack.c.bf16 %v689, %v689
        %v888 = vpack.c.bf16 %v692, %v692
        %v889 = vpack.c.bf16 %v694, %v694
        %v890 = vpack.c.bf16 %v697, %v697
        %v891 = vpack.c.bf16 %v699, %v699
        %v892 = vpack.c.bf16 %v702, %v702
        %v893 = vpack.c.bf16 %v704, %v704
        %v894 = vpack.c.bf16 %v707, %v707
        %v895 = vpack.c.bf16 %v709, %v709
        %v896 = vpack.c.bf16 %v712, %v712
        %v897 = vpack.c.bf16 %v714, %v714
        %v898 = vpack.c.bf16 %v717, %v717
        %v899 = vpack.c.bf16 %v719, %v719
        %v900 = vpack.c.bf16 %v722, %v722
        %v901 = vpack.c.bf16 %v724, %v724
        %v902 = vpack.c.bf16 %v727, %v727
        %v903 = vpack.c.bf16 %v729, %v729
        %v904 = vpack.c.bf16 %v732, %v732
        %v905 = vpack.c.bf16 %v734, %v734
        %v906 = vpack.c.bf16 %v737, %v737
        %v907 = vpack.c.bf16 %v739, %v739
        %v908 = vpack.c.bf16 %v742, %v742
        %v909 = vpack.c.bf16 %v744, %v744
        %v910 = vpack.c.bf16 %v747, %v747
        %v911 = vpack.c.bf16 %v749, %v749
        %v912 = vpack.c.bf16 %v752, %v752
        %v913 = vpack.c.bf16 %v754, %v754
        %v914 = vpack.c.bf16 %v757, %v757
        %v915 = vpack.c.bf16 %v759, %v759
        %v916 = vpack.c.bf16 %v762, %v762
        %v917 = vpack.c.bf16 %v764, %v764
        %v918 = vpack.c.bf16 %v767, %v767
        %v919 = vpack.c.bf16 %v769, %v769
        %v920 = vpack.c.bf16 %v772, %v772
        %v921 = vpack.c.bf16 %v774, %v774
        %v922 = vpack.c.bf16 %v777, %v777
        %v923 = vpack.c.bf16 %v779, %v779
        %v924 = vpack.c.bf16 %v782, %v782
        %v925 = vpack.c.bf16 %v784, %v784
        %v926 = vpack.c.bf16 %v787, %v787
        %v927 = vpack.c.bf16 %v789, %v789
        %v928 = vpack.c.bf16 %v792, %v792
        %v929 = vpack.c.bf16 %v794, %v794
        %v930 = vpack.c.bf16 %v797, %v797
        %v931 = vpack.c.bf16 %v799, %v799
        %v932 = vpack.c.bf16 %v802, %v802
        %v933 = vpack.c.bf16 %v804, %v804
        %934 = vst [vmem:[%s211] sm:$0xf] %v806
        %935 = vst [vmem:[%s211 + $0x4] sm:$0xf] %v807
        %936 = vst [vmem:[%s211 + $0x8] sm:$0xf] %v808
        %937 = vst [vmem:[%s211 + $0xc] sm:$0xf] %v809
        %938 = vst [vmem:[%s211 + $0x10] sm:$0xf] %v810
        %939 = vst [vmem:[%s211 + $0x14] sm:$0xf] %v811
        %940 = vst [vmem:[%s211 + $0x18] sm:$0xf] %v812
        %941 = vst [vmem:[%s211 + $0x1c] sm:$0xf] %v813
        %942 = vst [vmem:[%s211 + $0x20] sm:$0xf] %v814
        %943 = vst [vmem:[%s211 + $0x24] sm:$0xf] %v815
        %944 = vst [vmem:[%s211 + $0x28] sm:$0xf] %v816
        %945 = vst [vmem:[%s211 + $0x2c] sm:$0xf] %v817
        %946 = vst [vmem:[%s211 + $0x30] sm:$0xf] %v818
        %947 = vst [vmem:[%s211 + $0x34] sm:$0xf] %v819
        %948 = vst [vmem:[%s211 + $0x38] sm:$0xf] %v820
        %949 = vst [vmem:[%s211 + $0x3c] sm:$0xf] %v821
        %950 = vst [vmem:[%s211 + $0x40] sm:$0xf] %v822
        %951 = vst [vmem:[%s211 + $0x44] sm:$0xf] %v823
        %952 = vst [vmem:[%s211 + $0x48] sm:$0xf] %v824
        %953 = vst [vmem:[%s211 + $0x4c] sm:$0xf] %v825
        %954 = vst [vmem:[%s211 + $0x50] sm:$0xf] %v826
        %955 = vst [vmem:[%s211 + $0x54] sm:$0xf] %v827
        %956 = vst [vmem:[%s211 + $0x58] sm:$0xf] %v828
        %957 = vst [vmem:[%s211 + $0x5c] sm:$0xf] %v829
        %958 = vst [vmem:[%s211 + $0x60] sm:$0xf] %v830
        %959 = vst [vmem:[%s211 + $0x64] sm:$0xf] %v831
        %960 = vst [vmem:[%s211 + $0x68] sm:$0xf] %v832
        %961 = vst [vmem:[%s211 + $0x6c] sm:$0xf] %v833
        %962 = vst [vmem:[%s211 + $0x70] sm:$0xf] %v834
        %963 = vst [vmem:[%s211 + $0x74] sm:$0xf] %v835
        %964 = vst [vmem:[%s211 + $0x78] sm:$0xf] %v836
        %965 = vst [vmem:[%s211 + $0x7c] sm:$0xf] %v837
        %966 = vst [vmem:[%s211 + $0x80] sm:$0xf] %v838
        %967 = vst [vmem:[%s211 + $0x84] sm:$0xf] %v839
        %968 = vst [vmem:[%s211 + $0x88] sm:$0xf] %v840
        %969 = vst [vmem:[%s211 + $0x8c] sm:$0xf] %v841
        %970 = vst [vmem:[%s211 + $0x90] sm:$0xf] %v842
        %971 = vst [vmem:[%s211 + $0x94] sm:$0xf] %v843
        %972 = vst [vmem:[%s211 + $0x98] sm:$0xf] %v844
        %973 = vst [vmem:[%s211 + $0x9c] sm:$0xf] %v845
        %974 = vst [vmem:[%s211 + $0xa0] sm:$0xf] %v846
        %975 = vst [vmem:[%s211 + $0xa4] sm:$0xf] %v847
        %976 = vst [vmem:[%s211 + $0xa8] sm:$0xf] %v848
        %977 = vst [vmem:[%s211 + $0xac] sm:$0xf] %v849
        %978 = vst [vmem:[%s211 + $0xb0] sm:$0xf] %v850
        %979 = vst [vmem:[%s211 + $0xb4] sm:$0xf] %v851
        %980 = vst [vmem:[%s211 + $0xb8] sm:$0xf] %v852
        %981 = vst [vmem:[%s211 + $0xbc] sm:$0xf] %v853
        %982 = vst [vmem:[%s211 + $0xc0] sm:$0xf] %v854
        %983 = vst [vmem:[%s211 + $0xc4] sm:$0xf] %v855
        %984 = vst [vmem:[%s211 + $0xc8] sm:$0xf] %v856
        %985 = vst [vmem:[%s211 + $0xcc] sm:$0xf] %v857
        %986 = vst [vmem:[%s211 + $0xd0] sm:$0xf] %v858
        %987 = vst [vmem:[%s211 + $0xd4] sm:$0xf] %v859
        %988 = vst [vmem:[%s211 + $0xd8] sm:$0xf] %v860
        %989 = vst [vmem:[%s211 + $0xdc] sm:$0xf] %v861
        %990 = vst [vmem:[%s211 + $0xe0] sm:$0xf] %v862
        %991 = vst [vmem:[%s211 + $0xe4] sm:$0xf] %v863
        %992 = vst [vmem:[%s211 + $0xe8] sm:$0xf] %v864
        %993 = vst [vmem:[%s211 + $0xec] sm:$0xf] %v865
        %994 = vst [vmem:[%s211 + $0xf0] sm:$0xf] %v866
        %995 = vst [vmem:[%s211 + $0xf4] sm:$0xf] %v867
        %996 = vst [vmem:[%s211 + $0xf8] sm:$0xf] %v868
        %997 = vst [vmem:[%s211 + $0xfc] sm:$0xf] %v869
        %998 = vst [vmem:[%s211 + $0x100] sm:$0xf] %v870
        %999 = vst [vmem:[%s211 + $0x104] sm:$0xf] %v871
        %1000 = vst [vmem:[%s211 + $0x108] sm:$0xf] %v872
        %1001 = vst [vmem:[%s211 + $0x10c] sm:$0xf] %v873
        %1002 = vst [vmem:[%s211 + $0x110] sm:$0xf] %v874
        %1003 = vst [vmem:[%s211 + $0x114] sm:$0xf] %v875
        %1004 = vst [vmem:[%s211 + $0x118] sm:$0xf] %v876
        %1005 = vst [vmem:[%s211 + $0x11c] sm:$0xf] %v877
        %1006 = vst [vmem:[%s211 + $0x120] sm:$0xf] %v878
        %1007 = vst [vmem:[%s211 + $0x124] sm:$0xf] %v879
        %1008 = vst [vmem:[%s211 + $0x128] sm:$0xf] %v880
        %1009 = vst [vmem:[%s211 + $0x12c] sm:$0xf] %v881
        %1010 = vst [vmem:[%s211 + $0x130] sm:$0xf] %v882
        %1011 = vst [vmem:[%s211 + $0x134] sm:$0xf] %v883
        %1012 = vst [vmem:[%s211 + $0x138] sm:$0xf] %v884
        %1013 = vst [vmem:[%s211 + $0x13c] sm:$0xf] %v885
        %1014 = vst [vmem:[%s211 + $0x140] sm:$0xf] %v886
        %1015 = vst [vmem:[%s211 + $0x144] sm:$0xf] %v887
        %1016 = vst [vmem:[%s211 + $0x148] sm:$0xf] %v888
        %1017 = vst [vmem:[%s211 + $0x14c] sm:$0xf] %v889
        %1018 = vst [vmem:[%s211 + $0x150] sm:$0xf] %v890
        %1019 = vst [vmem:[%s211 + $0x154] sm:$0xf] %v891
        %1020 = vst [vmem:[%s211 + $0x158] sm:$0xf] %v892
        %1021 = vst [vmem:[%s211 + $0x15c] sm:$0xf] %v893
        %1022 = vst [vmem:[%s211 + $0x160] sm:$0xf] %v894
        %1023 = vst [vmem:[%s211 + $0x164] sm:$0xf] %v895
        %1024 = vst [vmem:[%s211 + $0x168] sm:$0xf] %v896
        %1025 = vst [vmem:[%s211 + $0x16c] sm:$0xf] %v897
        %1026 = vst [vmem:[%s211 + $0x170] sm:$0xf] %v898
        %1027 = vst [vmem:[%s211 + $0x174] sm:$0xf] %v899
        %1028 = vst [vmem:[%s211 + $0x178] sm:$0xf] %v900
        %1029 = vst [vmem:[%s211 + $0x17c] sm:$0xf] %v901
        %1030 = vst [vmem:[%s211 + $0x180] sm:$0xf] %v902
        %1031 = vst [vmem:[%s211 + $0x184] sm:$0xf] %v903
        %1032 = vst [vmem:[%s211 + $0x188] sm:$0xf] %v904
        %1033 = vst [vmem:[%s211 + $0x18c] sm:$0xf] %v905
        %1034 = vst [vmem:[%s211 + $0x190] sm:$0xf] %v906
        %1035 = vst [vmem:[%s211 + $0x194] sm:$0xf] %v907
        %1036 = vst [vmem:[%s211 + $0x198] sm:$0xf] %v908
        %1037 = vst [vmem:[%s211 + $0x19c] sm:$0xf] %v909
        %1038 = vst [vmem:[%s211 + $0x1a0] sm:$0xf] %v910
        %1039 = vst [vmem:[%s211 + $0x1a4] sm:$0xf] %v911
        %1040 = vst [vmem:[%s211 + $0x1a8] sm:$0xf] %v912
        %1041 = vst [vmem:[%s211 + $0x1ac] sm:$0xf] %v913
        %1042 = vst [vmem:[%s211 + $0x1b0] sm:$0xf] %v914
        %1043 = vst [vmem:[%s211 + $0x1b4] sm:$0xf] %v915
        %1044 = vst [vmem:[%s211 + $0x1b8] sm:$0xf] %v916
        %1045 = vst [vmem:[%s211 + $0x1bc] sm:$0xf] %v917
        %1046 = vst [vmem:[%s211 + $0x1c0] sm:$0xf] %v918
        %1047 = vst [vmem:[%s211 + $0x1c4] sm:$0xf] %v919
        %1048 = vst [vmem:[%s211 + $0x1c8] sm:$0xf] %v920
        %1049 = vst [vmem:[%s211 + $0x1cc] sm:$0xf] %v921
        %1050 = vst [vmem:[%s211 + $0x1d0] sm:$0xf] %v922
        %1051 = vst [vmem:[%s211 + $0x1d4] sm:$0xf] %v923
        %1052 = vst [vmem:[%s211 + $0x1d8] sm:$0xf] %v924
        %1053 = vst [vmem:[%s211 + $0x1dc] sm:$0xf] %v925
        %1054 = vst [vmem:[%s211 + $0x1e0] sm:$0xf] %v926
        %1055 = vst [vmem:[%s211 + $0x1e4] sm:$0xf] %v927
        %1056 = vst [vmem:[%s211 + $0x1e8] sm:$0xf] %v928
        %1057 = vst [vmem:[%s211 + $0x1ec] sm:$0xf] %v929
        %1058 = vst [vmem:[%s211 + $0x1f0] sm:$0xf] %v930
        %1059 = vst [vmem:[%s211 + $0x1f4] sm:$0xf] %v931
        %1060 = vst [vmem:[%s211 + $0x1f8] sm:$0xf] %v932
        %1061 = vst [vmem:[%s211 + $0x1fc] sm:$0xf] %v933
        %v1062 = vadd.f32 %v487, %v489
        %v1063 = vadd.f32 %v1062, %v492
        %v1064 = vadd.f32 %v1063, %v494
        %v1065 = vadd.f32 %v1064, %v497
        %v1066 = vadd.f32 %v1065, %v499
        %v1067 = vadd.f32 %v1066, %v502
        %v1068 = vadd.f32 %v1067, %v504
        %v1069 = vadd.f32 %v1068, %v507
        %v1070 = vadd.f32 %v1069, %v509
        %v1071 = vadd.f32 %v1070, %v512
        %v1072 = vadd.f32 %v1071, %v514
        %v1073 = vadd.f32 %v1072, %v517
        %v1074 = vadd.f32 %v1073, %v519
        %v1075 = vadd.f32 %v1074, %v522
        %v1076 = vadd.f32 %v1075, %v524
        %v1077 = vadd.f32 %v1076, %v527
        %v1078 = vadd.f32 %v1077, %v529
        %v1079 = vadd.f32 %v1078, %v532
        %v1080 = vadd.f32 %v1079, %v534
        %v1081 = vadd.f32 %v1080, %v537
        %v1082 = vadd.f32 %v1081, %v539
        %v1083 = vadd.f32 %v1082, %v542
        %v1084 = vadd.f32 %v1083, %v544
        %v1085 = vadd.f32 %v1084, %v547
        %v1086 = vadd.f32 %v1085, %v549
        %v1087 = vadd.f32 %v1086, %v552
        %v1088 = vadd.f32 %v1087, %v554
        %v1089 = vadd.f32 %v1088, %v557
        %v1090 = vadd.f32 %v1089, %v559
        %v1091 = vadd.f32 %v1090, %v562
        %v1092 = vadd.f32 %v1091, %v564
        %v1093 = vadd.f32 %v1092, %v567
        %v1094 = vadd.f32 %v1093, %v569
        %v1095 = vadd.f32 %v1094, %v572
        %v1096 = vadd.f32 %v1095, %v574
        %v1097 = vadd.f32 %v1096, %v577
        %v1098 = vadd.f32 %v1097, %v579
        %v1099 = vadd.f32 %v1098, %v582
        %v1100 = vadd.f32 %v1099, %v584
        %v1101 = vadd.f32 %v1100, %v587
        %v1102 = vadd.f32 %v1101, %v589
        %v1103 = vadd.f32 %v1102, %v592
        %v1104 = vadd.f32 %v1103, %v594
        %v1105 = vadd.f32 %v1104, %v597
        %v1106 = vadd.f32 %v1105, %v599
        %v1107 = vadd.f32 %v1106, %v602
        %v1108 = vadd.f32 %v1107, %v604
        %v1109 = vadd.f32 %v1108, %v607
        %v1110 = vadd.f32 %v1109, %v609
        %v1111 = vadd.f32 %v1110, %v612
        %v1112 = vadd.f32 %v1111, %v614
        %v1113 = vadd.f32 %v1112, %v617
        %v1114 = vadd.f32 %v1113, %v619
        %v1115 = vadd.f32 %v1114, %v622
        %v1116 = vadd.f32 %v1115, %v624
        %v1117 = vadd.f32 %v1116, %v627
        %v1118 = vadd.f32 %v1117, %v629
        %v1119 = vadd.f32 %v1118, %v632
        %v1120 = vadd.f32 %v1119, %v634
        %v1121 = vadd.f32 %v1120, %v637
        %v1122 = vadd.f32 %v1121, %v639
        %v1123 = vadd.f32 %v1122, %v642
        %v1124 = vadd.f32 %v1123, %v644
        %v1125 = vadd.f32 %v1124, %v647
        %v1126 = vadd.f32 %v1125, %v649
        %v1127 = vadd.f32 %v1126, %v652
        %v1128 = vadd.f32 %v1127, %v654
        %v1129 = vadd.f32 %v1128, %v657
        %v1130 = vadd.f32 %v1129, %v659
        %v1131 = vadd.f32 %v1130, %v662
        %v1132 = vadd.f32 %v1131, %v664
        %v1133 = vadd.f32 %v1132, %v667
        %v1134 = vadd.f32 %v1133, %v669
        %v1135 = vadd.f32 %v1134, %v672
        %v1136 = vadd.f32 %v1135, %v674
        %v1137 = vadd.f32 %v1136, %v677
        %v1138 = vadd.f32 %v1137, %v679
        %v1139 = vadd.f32 %v1138, %v682
        %v1140 = vadd.f32 %v1139, %v684
        %v1141 = vadd.f32 %v1140, %v687
        %v1142 = vadd.f32 %v1141, %v689
        %v1143 = vadd.f32 %v1142, %v692
        %v1144 = vadd.f32 %v1143, %v694
        %v1145 = vadd.f32 %v1144, %v697
        %v1146 = vadd.f32 %v1145, %v699
        %v1147 = vadd.f32 %v1146, %v702
        %v1148 = vadd.f32 %v1147, %v704
        %v1149 = vadd.f32 %v1148, %v707
        %v1150 = vadd.f32 %v1149, %v709
        %v1151 = vadd.f32 %v1150, %v712
        %v1152 = vadd.f32 %v1151, %v714
        %v1153 = vadd.f32 %v1152, %v717
        %v1154 = vadd.f32 %v1153, %v719
        %v1155 = vadd.f32 %v1154, %v722
        %v1156 = vadd.f32 %v1155, %v724
        %v1157 = vadd.f32 %v1156, %v727
        %v1158 = vadd.f32 %v1157, %v729
        %v1159 = vadd.f32 %v1158, %v732
        %v1160 = vadd.f32 %v1159, %v734
        %v1161 = vadd.f32 %v1160, %v737
        %v1162 = vadd.f32 %v1161, %v739
        %v1163 = vadd.f32 %v1162, %v742
        %v1164 = vadd.f32 %v1163, %v744
        %v1165 = vadd.f32 %v1164, %v747
        %v1166 = vadd.f32 %v1165, %v749
        %v1167 = vadd.f32 %v1166, %v752
        %v1168 = vadd.f32 %v1167, %v754
        %v1169 = vadd.f32 %v1168, %v757
        %v1170 = vadd.f32 %v1169, %v759
        %v1171 = vadd.f32 %v1170, %v762
        %v1172 = vadd.f32 %v1171, %v764
        %v1173 = vadd.f32 %v1172, %v767
        %v1174 = vadd.f32 %v1173, %v769
        %v1175 = vadd.f32 %v1174, %v772
        %v1176 = vadd.f32 %v1175, %v774
        %v1177 = vadd.f32 %v1176, %v777
        %v1178 = vadd.f32 %v1177, %v779
        %v1179 = vadd.f32 %v1178, %v782
        %v1180 = vadd.f32 %v1179, %v784
        %v1181 = vadd.f32 %v1180, %v787
        %v1182 = vadd.f32 %v1181, %v789
        %v1183 = vadd.f32 %v1182, %v792
        %v1184 = vadd.f32 %v1183, %v794
        %v1185 = vadd.f32 %v1184, %v797
        %v1186 = vadd.f32 %v1185, %v799
        %v1187 = vadd.f32 %v1186, %v802
        %v1188 = vadd.f32 %v1187, %v804
        %v1189 = vrot.slane %v1188, 4
        %v1190 = vadd.f32 %v1188, %v1189
        %v1191 = vrot.slane %v1190, 2
        %v1192 = vadd.f32 %v1190, %v1191
        %v1193 = vrot.slane %v1192, 1
        %v1194 = vadd.f32 %v1192, %v1193
        %v1195 = vrcp.pop 1024.0
        %v1196 = vmul.f32 1024.0, %v1195
        %v1197 = vsub.f32 1.0, %v1196
        %v1198 = vmul.f32 %v1195, %v1197
        %v1199 = vadd.f32 %v1195, %v1198
        %vm1200 = vweird.f32 %v1195
        %v1201 = vsel %vm1200, %v1195, %v1199
        %v1202 = vmul.f32 %v1194, %v1201
        %v1203 = vsub.f32 %v487, %v1202
        %v1204 = vsub.f32 %v489, %v1202
        %v1205 = vsub.f32 %v492, %v1202
        %v1206 = vsub.f32 %v494, %v1202
        %v1207 = vsub.f32 %v497, %v1202
        %v1208 = vsub.f32 %v499, %v1202
        %v1209 = vsub.f32 %v502, %v1202
        %v1210 = vsub.f32 %v504, %v1202
        %v1211 = vsub.f32 %v507, %v1202
        %v1212 = vsub.f32 %v509, %v1202
        %v1213 = vsub.f32 %v512, %v1202
        %v1214 = vsub.f32 %v514, %v1202
        %v1215 = vsub.f32 %v517, %v1202
        %v1216 = vsub.f32 %v519, %v1202
        %v1217 = vsub.f32 %v522, %v1202
        %v1218 = vsub.f32 %v524, %v1202
        %v1219 = vsub.f32 %v527, %v1202
        %v1220 = vsub.f32 %v529, %v1202
        %v1221 = vsub.f32 %v532, %v1202
        %v1222 = vsub.f32 %v534, %v1202
        %v1223 = vsub.f32 %v537, %v1202
        %v1224 = vsub.f32 %v539, %v1202
        %v1225 = vsub.f32 %v542, %v1202
        %v1226 = vsub.f32 %v544, %v1202
        %v1227 = vsub.f32 %v547, %v1202
        %v1228 = vsub.f32 %v549, %v1202
        %v1229 = vsub.f32 %v552, %v1202
        %v1230 = vsub.f32 %v554, %v1202
        %v1231 = vsub.f32 %v557, %v1202
        %v1232 = vsub.f32 %v559, %v1202
        %v1233 = vsub.f32 %v562, %v1202
        %v1234 = vsub.f32 %v564, %v1202
        %v1235 = vsub.f32 %v567, %v1202
        %v1236 = vsub.f32 %v569, %v1202
        %v1237 = vsub.f32 %v572, %v1202
        %v1238 = vsub.f32 %v574, %v1202
        %v1239 = vsub.f32 %v577, %v1202
        %v1240 = vsub.f32 %v579, %v1202
        %v1241 = vsub.f32 %v582, %v1202
        %v1242 = vsub.f32 %v584, %v1202
        %v1243 = vsub.f32 %v587, %v1202
        %v1244 = vsub.f32 %v589, %v1202
        %v1245 = vsub.f32 %v592, %v1202
        %v1246 = vsub.f32 %v594, %v1202
        %v1247 = vsub.f32 %v597, %v1202
        %v1248 = vsub.f32 %v599, %v1202
        %v1249 = vsub.f32 %v602, %v1202
        %v1250 = vsub.f32 %v604, %v1202
        %v1251 = vsub.f32 %v607, %v1202
        %v1252 = vsub.f32 %v609, %v1202
        %v1253 = vsub.f32 %v612, %v1202
        %v1254 = vsub.f32 %v614, %v1202
        %v1255 = vsub.f32 %v617, %v1202
        %v1256 = vsub.f32 %v619, %v1202
        %v1257 = vsub.f32 %v622, %v1202
        %v1258 = vsub.f32 %v624, %v1202
        %v1259 = vsub.f32 %v627, %v1202
        %v1260 = vsub.f32 %v629, %v1202
        %v1261 = vsub.f32 %v632, %v1202
        %v1262 = vsub.f32 %v634, %v1202
        %v1263 = vsub.f32 %v637, %v1202
        %v1264 = vsub.f32 %v639, %v1202
        %v1265 = vsub.f32 %v642, %v1202
        %v1266 = vsub.f32 %v644, %v1202
        %v1267 = vsub.f32 %v647, %v1202
        %v1268 = vsub.f32 %v649, %v1202
        %v1269 = vsub.f32 %v652, %v1202
        %v1270 = vsub.f32 %v654, %v1202
        %v1271 = vsub.f32 %v657, %v1202
        %v1272 = vsub.f32 %v659, %v1202
        %v1273 = vsub.f32 %v662, %v1202
        %v1274 = vsub.f32 %v664, %v1202
        %v1275 = vsub.f32 %v667, %v1202
        %v1276 = vsub.f32 %v669, %v1202
        %v1277 = vsub.f32 %v672, %v1202
        %v1278 = vsub.f32 %v674, %v1202
        %v1279 = vsub.f32 %v677, %v1202
        %v1280 = vsub.f32 %v679, %v1202
        %v1281 = vsub.f32 %v682, %v1202
        %v1282 = vsub.f32 %v684, %v1202
        %v1283 = vsub.f32 %v687, %v1202
        %v1284 = vsub.f32 %v689, %v1202
        %v1285 = vsub.f32 %v692, %v1202
        %v1286 = vsub.f32 %v694, %v1202
        %v1287 = vsub.f32 %v697, %v1202
        %v1288 = vsub.f32 %v699, %v1202
        %v1289 = vsub.f32 %v702, %v1202
        %v1290 = vsub.f32 %v704, %v1202
        %v1291 = vsub.f32 %v707, %v1202
        %v1292 = vsub.f32 %v709, %v1202
        %v1293 = vsub.f32 %v712, %v1202
        %v1294 = vsub.f32 %v714, %v1202
        %v1295 = vsub.f32 %v717, %v1202
        %v1296 = vsub.f32 %v719, %v1202
        %v1297 = vsub.f32 %v722, %v1202
        %v1298 = vsub.f32 %v724, %v1202
        %v1299 = vsub.f32 %v727, %v1202
        %v1300 = vsub.f32 %v729, %v1202
        %v1301 = vsub.f32 %v732, %v1202
        %v1302 = vsub.f32 %v734, %v1202
        %v1303 = vsub.f32 %v737, %v1202
        %v1304 = vsub.f32 %v739, %v1202
        %v1305 = vsub.f32 %v742, %v1202
        %v1306 = vsub.f32 %v744, %v1202
        %v1307 = vsub.f32 %v747, %v1202
        %v1308 = vsub.f32 %v749, %v1202
        %v1309 = vsub.f32 %v752, %v1202
        %v1310 = vsub.f32 %v754, %v1202
        %v1311 = vsub.f32 %v757, %v1202
        %v1312 = vsub.f32 %v759, %v1202
        %v1313 = vsub.f32 %v762, %v1202
        %v1314 = vsub.f32 %v764, %v1202
        %v1315 = vsub.f32 %v767, %v1202
        %v1316 = vsub.f32 %v769, %v1202
        %v1317 = vsub.f32 %v772, %v1202
        %v1318 = vsub.f32 %v774, %v1202
        %v1319 = vsub.f32 %v777, %v1202
        %v1320 = vsub.f32 %v779, %v1202
        %v1321 = vsub.f32 %v782, %v1202
        %v1322 = vsub.f32 %v784, %v1202
        %v1323 = vsub.f32 %v787, %v1202
        %v1324 = vsub.f32 %v789, %v1202
        %v1325 = vsub.f32 %v792, %v1202
        %v1326 = vsub.f32 %v794, %v1202
        %v1327 = vsub.f32 %v797, %v1202
        %v1328 = vsub.f32 %v799, %v1202
        %v1329 = vsub.f32 %v802, %v1202
        %v1330 = vsub.f32 %v804, %v1202
        %v1331 = vmul.f32 %v1203, %v1203
        %v1332 = vmul.f32 %v1204, %v1204
        %v1333 = vmul.f32 %v1205, %v1205
        %v1334 = vmul.f32 %v1206, %v1206
        %v1335 = vmul.f32 %v1207, %v1207
        %v1336 = vmul.f32 %v1208, %v1208
        %v1337 = vmul.f32 %v1209, %v1209
        %v1338 = vmul.f32 %v1210, %v1210
        %v1339 = vmul.f32 %v1211, %v1211
        %v1340 = vmul.f32 %v1212, %v1212
        %v1341 = vmul.f32 %v1213, %v1213
        %v1342 = vmul.f32 %v1214, %v1214
        %v1343 = vmul.f32 %v1215, %v1215
        %v1344 = vmul.f32 %v1216, %v1216
        %v1345 = vmul.f32 %v1217, %v1217
        %v1346 = vmul.f32 %v1218, %v1218
        %v1347 = vmul.f32 %v1219, %v1219
        %v1348 = vmul.f32 %v1220, %v1220
        %v1349 = vmul.f32 %v1221, %v1221
        %v1350 = vmul.f32 %v1222, %v1222
        %v1351 = vmul.f32 %v1223, %v1223
        %v1352 = vmul.f32 %v1224, %v1224
        %v1353 = vmul.f32 %v1225, %v1225
        %v1354 = vmul.f32 %v1226, %v1226
        %v1355 = vmul.f32 %v1227, %v1227
        %v1356 = vmul.f32 %v1228, %v1228
        %v1357 = vmul.f32 %v1229, %v1229
        %v1358 = vmul.f32 %v1230, %v1230
        %v1359 = vmul.f32 %v1231, %v1231
        %v1360 = vmul.f32 %v1232, %v1232
        %v1361 = vmul.f32 %v1233, %v1233
        %v1362 = vmul.f32 %v1234, %v1234
        %v1363 = vmul.f32 %v1235, %v1235
        %v1364 = vmul.f32 %v1236, %v1236
        %v1365 = vmul.f32 %v1237, %v1237
        %v1366 = vmul.f32 %v1238, %v1238
        %v1367 = vmul.f32 %v1239, %v1239
        %v1368 = vmul.f32 %v1240, %v1240
        %v1369 = vmul.f32 %v1241, %v1241
        %v1370 = vmul.f32 %v1242, %v1242
        %v1371 = vmul.f32 %v1243, %v1243
        %v1372 = vmul.f32 %v1244, %v1244
        %v1373 = vmul.f32 %v1245, %v1245
        %v1374 = vmul.f32 %v1246, %v1246
        %v1375 = vmul.f32 %v1247, %v1247
        %v1376 = vmul.f32 %v1248, %v1248
        %v1377 = vmul.f32 %v1249, %v1249
        %v1378 = vmul.f32 %v1250, %v1250
        %v1379 = vmul.f32 %v1251, %v1251
        %v1380 = vmul.f32 %v1252, %v1252
        %v1381 = vmul.f32 %v1253, %v1253
        %v1382 = vmul.f32 %v1254, %v1254
        %v1383 = vmul.f32 %v1255, %v1255
        %v1384 = vmul.f32 %v1256, %v1256
        %v1385 = vmul.f32 %v1257, %v1257
        %v1386 = vmul.f32 %v1258, %v1258
        %v1387 = vmul.f32 %v1259, %v1259
        %v1388 = vmul.f32 %v1260, %v1260
        %v1389 = vmul.f32 %v1261, %v1261
        %v1390 = vmul.f32 %v1262, %v1262
        %v1391 = vmul.f32 %v1263, %v1263
        %v1392 = vmul.f32 %v1264, %v1264
        %v1393 = vmul.f32 %v1265, %v1265
        %v1394 = vmul.f32 %v1266, %v1266
        %v1395 = vmul.f32 %v1267, %v1267
        %v1396 = vmul.f32 %v1268, %v1268
        %v1397 = vmul.f32 %v1269, %v1269
        %v1398 = vmul.f32 %v1270, %v1270
        %v1399 = vmul.f32 %v1271, %v1271
        %v1400 = vmul.f32 %v1272, %v1272
        %v1401 = vmul.f32 %v1273, %v1273
        %v1402 = vmul.f32 %v1274, %v1274
        %v1403 = vmul.f32 %v1275, %v1275
        %v1404 = vmul.f32 %v1276, %v1276
        %v1405 = vmul.f32 %v1277, %v1277
        %v1406 = vmul.f32 %v1278, %v1278
        %v1407 = vmul.f32 %v1279, %v1279
        %v1408 = vmul.f32 %v1280, %v1280
        %v1409 = vmul.f32 %v1281, %v1281
        %v1410 = vmul.f32 %v1282, %v1282
        %v1411 = vmul.f32 %v1283, %v1283
        %v1412 = vmul.f32 %v1284, %v1284
        %v1413 = vmul.f32 %v1285, %v1285
        %v1414 = vmul.f32 %v1286, %v1286
        %v1415 = vmul.f32 %v1287, %v1287
        %v1416 = vmul.f32 %v1288, %v1288
        %v1417 = vmul.f32 %v1289, %v1289
        %v1418 = vmul.f32 %v1290, %v1290
        %v1419 = vmul.f32 %v1291, %v1291
        %v1420 = vmul.f32 %v1292, %v1292
        %v1421 = vmul.f32 %v1293, %v1293
        %v1422 = vmul.f32 %v1294, %v1294
        %v1423 = vmul.f32 %v1295, %v1295
        %v1424 = vmul.f32 %v1296, %v1296
        %v1425 = vmul.f32 %v1297, %v1297
        %v1426 = vmul.f32 %v1298, %v1298
        %v1427 = vmul.f32 %v1299, %v1299
        %v1428 = vmul.f32 %v1300, %v1300
        %v1429 = vmul.f32 %v1301, %v1301
        %v1430 = vmul.f32 %v1302, %v1302
        %v1431 = vmul.f32 %v1303, %v1303
        %v1432 = vmul.f32 %v1304, %v1304
        %v1433 = vmul.f32 %v1305, %v1305
        %v1434 = vmul.f32 %v1306, %v1306
        %v1435 = vmul.f32 %v1307, %v1307
        %v1436 = vmul.f32 %v1308, %v1308
        %v1437 = vmul.f32 %v1309, %v1309
        %v1438 = vmul.f32 %v1310, %v1310
        %v1439 = vmul.f32 %v1311, %v1311
        %v1440 = vmul.f32 %v1312, %v1312
        %v1441 = vmul.f32 %v1313, %v1313
        %v1442 = vmul.f32 %v1314, %v1314
        %v1443 = vmul.f32 %v1315, %v1315
        %v1444 = vmul.f32 %v1316, %v1316
        %v1445 = vmul.f32 %v1317, %v1317
        %v1446 = vmul.f32 %v1318, %v1318
        %v1447 = vmul.f32 %v1319, %v1319
        %v1448 = vmul.f32 %v1320, %v1320
        %v1449 = vmul.f32 %v1321, %v1321
        %v1450 = vmul.f32 %v1322, %v1322
        %v1451 = vmul.f32 %v1323, %v1323
        %v1452 = vmul.f32 %v1324, %v1324
        %v1453 = vmul.f32 %v1325, %v1325
        %v1454 = vmul.f32 %v1326, %v1326
        %v1455 = vmul.f32 %v1327, %v1327
        %v1456 = vmul.f32 %v1328, %v1328
        %v1457 = vmul.f32 %v1329, %v1329
        %v1458 = vmul.f32 %v1330, %v1330
        %v1459 = vadd.f32 %v1331, %v1332
        %v1460 = vadd.f32 %v1459, %v1333
        %v1461 = vadd.f32 %v1460, %v1334
        %v1462 = vadd.f32 %v1461, %v1335
        %v1463 = vadd.f32 %v1462, %v1336
        %v1464 = vadd.f32 %v1463, %v1337
        %v1465 = vadd.f32 %v1464, %v1338
        %v1466 = vadd.f32 %v1465, %v1339
        %v1467 = vadd.f32 %v1466, %v1340
        %v1468 = vadd.f32 %v1467, %v1341
        %v1469 = vadd.f32 %v1468, %v1342
        %v1470 = vadd.f32 %v1469, %v1343
        %v1471 = vadd.f32 %v1470, %v1344
        %v1472 = vadd.f32 %v1471, %v1345
        %v1473 = vadd.f32 %v1472, %v1346
        %v1474 = vadd.f32 %v1473, %v1347
        %v1475 = vadd.f32 %v1474, %v1348
        %v1476 = vadd.f32 %v1475, %v1349
        %v1477 = vadd.f32 %v1476, %v1350
        %v1478 = vadd.f32 %v1477, %v1351
        %v1479 = vadd.f32 %v1478, %v1352
        %v1480 = vadd.f32 %v1479, %v1353
        %v1481 = vadd.f32 %v1480, %v1354
        %v1482 = vadd.f32 %v1481, %v1355
        %v1483 = vadd.f32 %v1482, %v1356
        %v1484 = vadd.f32 %v1483, %v1357
        %v1485 = vadd.f32 %v1484, %v1358
        %v1486 = vadd.f32 %v1485, %v1359
        %v1487 = vadd.f32 %v1486, %v1360
        %v1488 = vadd.f32 %v1487, %v1361
        %v1489 = vadd.f32 %v1488, %v1362
        %v1490 = vadd.f32 %v1489, %v1363
        %v1491 = vadd.f32 %v1490, %v1364
        %v1492 = vadd.f32 %v1491, %v1365
        %v1493 = vadd.f32 %v1492, %v1366
        %v1494 = vadd.f32 %v1493, %v1367
        %v1495 = vadd.f32 %v1494, %v1368
        %v1496 = vadd.f32 %v1495, %v1369
        %v1497 = vadd.f32 %v1496, %v1370
        %v1498 = vadd.f32 %v1497, %v1371
        %v1499 = vadd.f32 %v1498, %v1372
        %v1500 = vadd.f32 %v1499, %v1373
        %v1501 = vadd.f32 %v1500, %v1374
        %v1502 = vadd.f32 %v1501, %v1375
        %v1503 = vadd.f32 %v1502, %v1376
        %v1504 = vadd.f32 %v1503, %v1377
        %v1505 = vadd.f32 %v1504, %v1378
        %v1506 = vadd.f32 %v1505, %v1379
        %v1507 = vadd.f32 %v1506, %v1380
        %v1508 = vadd.f32 %v1507, %v1381
        %v1509 = vadd.f32 %v1508, %v1382
        %v1510 = vadd.f32 %v1509, %v1383
        %v1511 = vadd.f32 %v1510, %v1384
        %v1512 = vadd.f32 %v1511, %v1385
        %v1513 = vadd.f32 %v1512, %v1386
        %v1514 = vadd.f32 %v1513, %v1387
        %v1515 = vadd.f32 %v1514, %v1388
        %v1516 = vadd.f32 %v1515, %v1389
        %v1517 = vadd.f32 %v1516, %v1390
        %v1518 = vadd.f32 %v1517, %v1391
        %v1519 = vadd.f32 %v1518, %v1392
        %v1520 = vadd.f32 %v1519, %v1393
        %v1521 = vadd.f32 %v1520, %v1394
        %v1522 = vadd.f32 %v1521, %v1395
        %v1523 = vadd.f32 %v1522, %v1396
        %v1524 = vadd.f32 %v1523, %v1397
        %v1525 = vadd.f32 %v1524, %v1398
        %v1526 = vadd.f32 %v1525, %v1399
        %v1527 = vadd.f32 %v1526, %v1400
        %v1528 = vadd.f32 %v1527, %v1401
        %v1529 = vadd.f32 %v1528, %v1402
        %v1530 = vadd.f32 %v1529, %v1403
        %v1531 = vadd.f32 %v1530, %v1404
        %v1532 = vadd.f32 %v1531, %v1405
        %v1533 = vadd.f32 %v1532, %v1406
        %v1534 = vadd.f32 %v1533, %v1407
        %v1535 = vadd.f32 %v1534, %v1408
        %v1536 = vadd.f32 %v1535, %v1409
        %v1537 = vadd.f32 %v1536, %v1410
        %v1538 = vadd.f32 %v1537, %v1411
        %v1539 = vadd.f32 %v1538, %v1412
        %v1540 = vadd.f32 %v1539, %v1413
        %v1541 = vadd.f32 %v1540, %v1414
        %v1542 = vadd.f32 %v1541, %v1415
        %v1543 = vadd.f32 %v1542, %v1416
        %v1544 = vadd.f32 %v1543, %v1417
        %v1545 = vadd.f32 %v1544, %v1418
        %v1546 = vadd.f32 %v1545, %v1419
        %v1547 = vadd.f32 %v1546, %v1420
        %v1548 = vadd.f32 %v1547, %v1421
        %v1549 = vadd.f32 %v1548, %v1422
        %v1550 = vadd.f32 %v1549, %v1423
        %v1551 = vadd.f32 %v1550, %v1424
        %v1552 = vadd.f32 %v1551, %v1425
        %v1553 = vadd.f32 %v1552, %v1426
        %v1554 = vadd.f32 %v1553, %v1427
        %v1555 = vadd.f32 %v1554, %v1428
        %v1556 = vadd.f32 %v1555, %v1429
        %v1557 = vadd.f32 %v1556, %v1430
        %v1558 = vadd.f32 %v1557, %v1431
        %v1559 = vadd.f32 %v1558, %v1432
        %v1560 = vadd.f32 %v1559, %v1433
        %v1561 = vadd.f32 %v1560, %v1434
        %v1562 = vadd.f32 %v1561, %v1435
        %v1563 = vadd.f32 %v1562, %v1436
        %v1564 = vadd.f32 %v1563, %v1437
        %v1565 = vadd.f32 %v1564, %v1438
        %v1566 = vadd.f32 %v1565, %v1439
        %v1567 = vadd.f32 %v1566, %v1440
        %v1568 = vadd.f32 %v1567, %v1441
        %v1569 = vadd.f32 %v1568, %v1442
        %v1570 = vadd.f32 %v1569, %v1443
        %v1571 = vadd.f32 %v1570, %v1444
        %v1572 = vadd.f32 %v1571, %v1445
        %v1573 = vadd.f32 %v1572, %v1446
        %v1574 = vadd.f32 %v1573, %v1447
        %v1575 = vadd.f32 %v1574, %v1448
        %v1576 = vadd.f32 %v1575, %v1449
        %v1577 = vadd.f32 %v1576, %v1450
        %v1578 = vadd.f32 %v1577, %v1451
        %v1579 = vadd.f32 %v1578, %v1452
        %v1580 = vadd.f32 %v1579, %v1453
        %v1581 = vadd.f32 %v1580, %v1454
        %v1582 = vadd.f32 %v1581, %v1455
        %v1583 = vadd.f32 %v1582, %v1456
        %v1584 = vadd.f32 %v1583, %v1457
        %v1585 = vadd.f32 %v1584, %v1458
        %v1586 = vrot.slane %v1585, 4
        %v1587 = vadd.f32 %v1585, %v1586
        %v1588 = vrot.slane %v1587, 2
        %v1589 = vadd.f32 %v1587, %v1588
        %v1590 = vrot.slane %v1589, 1
        %v1591 = vadd.f32 %v1589, %v1590
        %vm1592 = vcmask 1040384
        %v1593 = vsel %vm1592, %v1194, %v1591
        %1594 = vst [vmem:[%s218] sm:$0x3] %v1593
        %s1595 = sand.u32 %s80, 1
        %s1596 = scalar_lea.sflag [#allocation4], %s1595
        %s1597 = sand.u32 %s80, 1
        %s1598 = smul.addr %s1597, 512
        %s1599 = scalar_lea.vmem [#allocation7], %s1598
        %s1600 = sand.u32 %s106, 1
        %s1601 = scalar_lea.sflag [#allocation9], %s1600
        %s1602 = sand.u32 %s106, 1
        %s1603 = smul.addr %s1602, 2
        %s1604 = scalar_lea.vmem [#allocation8], %s1603
        // Predicated region
        $region37: #{tpu_custom_call.1} parent=27 // pred_check
          %p1605 = pneg %p90
        $region38: #{tpu_custom_call.1} parent=27 // pred_check_branch
          %1607 = sbr.rel (%p1605) target = $region40
        $region39: #{tpu_custom_call.1} parent=27 // pred_region
          %s1608 = smul.u32 128, %s25
          %1610 = vsyncadd %s1596, 0
          %s1611 = smul.addr %s1608, 4
          %s1612 = scalar_lea.hbm %s2, %s1611
          %s1613 = sshll.u32 %s1599, 4
          %s1614 = int_to_ptr.vmem [resolvable:$true] %s1613
          %s1615 = sshll.u32 %s1612, 4
          %s1616 = int_to_ptr.hbm [resolvable:$true] %s1615
          %1621 = dma.vmem_to_hbm [thread:$0]  %s1614, 8192, %s1616, %s1596, 64, 64, 4
        $region40: #{tpu_custom_call.1} parent=27 // pred_fallthru
          _
        // Predicated region
        $region41: #{tpu_custom_call.1} parent=27 // pred_check
          %p1622 = pneg %p116
        $region42: #{tpu_custom_call.1} parent=27 // pred_check_branch
          %1624 = sbr.rel (%p1622) target = $region44
        $region43: #{tpu_custom_call.1} parent=27 // pred_region
          %1626 = vsyncadd %s1601, 0
          %s1627 = smul.addr %s25, 2
          %s1628 = scalar_lea.hbm %s3, %s1627
          %s1630 = sshll.u32 %s1604, 4
          %s1631 = int_to_ptr.vmem [resolvable:$true] %s1630
          %s1632 = sshll.u32 %s1628, 4
          %s1633 = int_to_ptr.hbm [resolvable:$true] %s1632
          %1635 = dma.vmem_to_hbm [thread:$0]  %s1631, 32, %s1633, %s1601
        $region44: #{tpu_custom_call.1} parent=27 // pred_fallthru
          _
      $region28: #{tpu_custom_call.1} parent=5 // pred_fallthru
        _
      %p1636 = scmp.le.s32.totalorder 2, %s20
      // Predicated region
      $region45: #{tpu_custom_call.1} parent=5 // pred_check
        %p1637 = pneg %p1636
      $region46: #{tpu_custom_call.1} parent=5 // pred_check_branch
        %1639 = sbr.rel (%p1637) target = $region48
      $region47: #{tpu_custom_call.1} parent=5 // pred_region
        %s1640 = ssub.s32 %s20, 2
        // Predicated region
        $region49: #{tpu_custom_call.1} parent=47 // pred_check
          %p1641 = pneg %p96
        $region50: #{tpu_custom_call.1} parent=47 // pred_check_branch
          %1643 = sbr.rel (%p1641) target = $region52
        $region51: #{tpu_custom_call.1} parent=47 // pred_region
          %s1644 = sand.u32 %s81, 1
          %s1645 = scalar_lea.sflag [#allocation4], %s1644
          %s1646 = sand.u32 %s81, 1
          %s1647 = smul.addr %s1646, 512
          %s1648 = scalar_lea.vmem [#allocation7], %s1647
          %1650 = dma.done %s1645, 8192
        $region52: #{tpu_custom_call.1} parent=47 // pred_fallthru
          _
        // Predicated region
        $region53: #{tpu_custom_call.1} parent=47 // pred_check
          %p1651 = pneg %p122
        $region54: #{tpu_custom_call.1} parent=47 // pred_check_branch
          %1653 = sbr.rel (%p1651) target = $region56
        $region55: #{tpu_custom_call.1} parent=47 // pred_region
          %s1654 = sand.u32 %s107, 1
          %s1655 = scalar_lea.sflag [#allocation9], %s1654
          %s1656 = sand.u32 %s107, 1
          %s1657 = smul.addr %s1656, 2
          %s1658 = scalar_lea.vmem [#allocation8], %s1657
          %1660 = dma.done %s1655, 32
        $region56: #{tpu_custom_call.1} parent=47 // pred_fallthru
          _
      $region48: #{tpu_custom_call.1} parent=5 // pred_fallthru
        _
    $region6: #{tpu_custom_call.1} parent=1 // loop_footer
      %s24 = sadd.s32 1, %s20
    $region7: #{tpu_custom_call.1} parent=1 // loop_footer_branch
      %19 = sbr.rel target = $region3
    $region8: #{tpu_custom_call.1} parent=1 // loop_exit
      _
    %1661 = vsyncpa [#allocation3], 1
    %s1662 = scalar_lea.sflag [#allocation3], 1
    %1663 = vsyncpa %s1662, 1
    %1664 = vsyncpa [#allocation6], 1
    %1665 = vsyncpa [#allocation4], 1
    %s1666 = scalar_lea.sflag [#allocation4], 1
    %1667 = vsyncpa %s1666, 1
    %1668 = vsyncpa [#allocation9], 1
    %s1669 = scalar_lea.sflag [#allocation9], 1
    %1670 = vsyncpa %s1669, 1

</llo_original>
